<compile_context>
chip_gen: v7x
topology: tpu7x:2x2x1
jax: 0.10.0
libtpu: 0.0.40
codegen_flags: <defaults>
</compile_context>

<pallas_src>
import jax
import jax.numpy as jnp
from jax import lax
from jax.experimental import pallas as pl
from jax.experimental.pallas import tpu as pltpu


# The canonical edge types of the heterogeneous query-plan graph (synthetic subset).
UDF_CANONICAL_EDGE_TYPES = [
    ("column", "col_to_output_column", "output_column"),
    ("output_column", "output_column_to_plan", "plan"),
    ("plan", "intra_plan", "plan"),
]

HP = 128                                     # lane-dense (padded) hidden width
_SENTINEL = jnp.iinfo(jnp.int32).min         # tag for padded (invalid) edges


def _round_up(n, m):
    return ((n + m - 1) // m) * m


def _fused_topo_mp_kernel(depths_ref,
                          dd0_ref, dd1_ref, dd2_ref,
                          h_col_ref, h_out_ref, h_plan_ref,
                          w_ref, b_ref,
                          o_out_ref, o_plan_ref, found_ref):
    """Fused message passing over all 3 canonical edge types, iterated over a
    prefetched depth schedule (grid axis 0).

    depths_ref : (D,)        int32 SMEM (scalar prefetch) depth schedule
    ddX_ref    : (3, E)      int32  row0=dst id, row1=edge depth, row2=src id
    h_*_ref    : (N, HP)     f32    node features (hidden zero-padded to HP lanes)
    w_ref      : (3,2,HP,HP) bf16   [etype, {self,msg}] MscnAggregator weights
    b_ref      : (3,1,HP)    f32    biases
    o_*_ref    : (N, HP)     f32    updated features (carried state across depths)
    found_ref  : (1,1)       int32  edge_matching_depth_found (OR over depths)
    """
    d_idx = pl.program_id(0)
    depth = depths_ref[d_idx]

    @pl.when(d_idx == 0)
    def _init():
        o_out_ref[...] = h_out_ref[...]
        o_plan_ref[...] = h_plan_ref[...]
        found_ref[...] = jnp.zeros_like(found_ref)

    def step(dd_ref, h_src, h_dst, i):
        e_pad = dd_ref.shape[1]
        n_src = h_src.shape[0]
        n_dst = h_dst.shape[0]

        dst_row = dd_ref[0:1, :]                                    # (1, E)
        dep_row = dd_ref[1:2, :]                                    # (1, E)
        src_row = dd_ref[2:3, :]                                    # (1, E)
        sel = dep_row == depth                                      # (1, E)

        # dst/src one-hots (edge axis on lanes); padded edges excluded via sel.
        d_hit = jnp.logical_and(
            lax.broadcasted_iota(jnp.int32, (n_dst, e_pad), 0) == dst_row,
            sel).astype(jnp.bfloat16)                               # (N_dst, E)
        s_hit = (lax.broadcasted_iota(jnp.int32, (n_src, e_pad), 0)
                 == src_row).astype(jnp.bfloat16)                   # (N_src, E)

        # Adjacency-first: A[d,s] = #selected edges s->d (small exact integers).
        adj = lax.dot_general(d_hit, s_hit,
                              dimension_numbers=(((1,), (1,)), ((), ())),
                              preferred_element_type=jnp.float32)   # (N_dst, N_src)

        # fn.copy_src('h','m') + fn.sum('m','ft') == A @ h_src.
        ft = jnp.dot(adj.astype(jnp.bfloat16), h_src.astype(jnp.bfloat16),
                     preferred_element_type=jnp.float32)            # (N_dst, HP)

        # dst nodes with a selected in-edge + "any edge matched depth" flag.
        mask = jnp.sum(adj, axis=1, keepdims=True) > 0.0            # (N_dst, 1)
        has = jnp.sum(sel.astype(jnp.float32), axis=1, keepdims=True) > 0.0  # (1,1)

        # MscnAggregator: two accumulating matmuls (no concat copy) + LeakyReLU.
        z = (jnp.dot(h_dst.astype(jnp.bfloat16), w_ref[i, 0],
                     preferred_element_type=jnp.float32)
             + jnp.dot(ft.astype(jnp.bfloat16), w_ref[i, 1],
                       preferred_element_type=jnp.float32)
             + b_ref[i])
        res = jnp.where(z > 0, z, 0.01 * z)                         # LeakyReLU(0.01)

        # torch.where(bitmap, res, feat_dict[dst]); no-op if no edges matched.
        return jnp.where(mask, res, h_dst), has

    h_col = h_col_ref[...]
    h_out = o_out_ref[...]       # carried state (init'd at d_idx == 0)
    h_plan = o_plan_ref[...]

    # Sequential dependency: step 2 consumes step 1's output_column update,
    # step 3 consumes step 2's plan update — all VMEM/vreg resident.
    h_out, has0 = step(dd0_ref, h_col, h_out, 0)
    h_plan, has1 = step(dd1_ref, h_out, h_plan, 1)
    h_plan, has2 = step(dd2_ref, h_plan, h_plan, 2)

    o_out_ref[...] = h_out.astype(o_out_ref.dtype)
    o_plan_ref[...] = h_plan.astype(o_plan_ref.dtype)
    found_now = jnp.logical_or(jnp.logical_or(has0, has1), has2).astype(jnp.int32)
    found_ref[...] = jnp.maximum(found_ref[...], found_now)


@jax.jit
def _fused_forward(w_all, b_all, edges, feats, depth_arr):
    """w_all: (3,2,HP,HP) bf16, b_all: (3,1,HP) f32
       edges: 3x (src_ids, dst_ids, e_depth) int arrays
       feats: (h_column, h_output_column, h_plan) f32 (N, H)
       depth_arr: (D,) int32 depth schedule (D=1 == module forward)."""

    def pad_feat(x):
        n, h = x.shape
        return jnp.pad(x, ((0, _round_up(max(n, 8), 8) - n), (0, HP - h)))

    def edge_tensor(src_ids, dst_ids, e_depth):
        e = src_ids.shape[0]
        e_pad = _round_up(max(e, 1), 128)
        dd = jnp.full((3, e_pad), _SENTINEL, jnp.int32)
        dd = dd.at[0, :e].set(dst_ids.astype(jnp.int32))
        dd = dd.at[1, :e].set(e_depth.astype(jnp.int32))
        dd = dd.at[2, :e].set(src_ids.astype(jnp.int32))
        return dd

    h_col, h_out, h_plan = feats
    n_out, hidden = h_out.shape
    n_plan = h_plan.shape[0]
    hc, ho, hpl = pad_feat(h_col), pad_feat(h_out), pad_feat(h_plan)

    dd0 = edge_tensor(*edges[0])
    dd1 = edge_tensor(*edges[1])
    dd2 = edge_tensor(*edges[2])

    operands = (dd0, dd1, dd2, hc, ho, hpl, w_all, b_all)

    def resident(shape):
        zeros = (0,) * len(shape)
        return pl.BlockSpec(shape, lambda d, depths, _z=zeros: _z)

    num_depths = depth_arr.shape[0]

    o_out, o_plan, found = pl.pallas_call(
        _fused_topo_mp_kernel,
        out_shape=(jax.ShapeDtypeStruct(ho.shape, jnp.float32),
                   jax.ShapeDtypeStruct(hpl.shape, jnp.float32),
                   jax.ShapeDtypeStruct((1, 1), jnp.int32)),
        grid_spec=pltpu.PrefetchScalarGridSpec(
            num_scalar_prefetch=1,
            grid=(num_depths,),
            in_specs=[resident(x.shape) for x in operands],
            out_specs=(resident(ho.shape),
                       resident(hpl.shape),
                       resident((1, 1))),
        ),
        compiler_params=pltpu.CompilerParams(
            dimension_semantics=("arbitrary",)),   # sequential state over depths
    )(depth_arr, *operands)

    return (o_out[:n_out, :hidden], o_plan[:n_plan, :hidden], found[0, 0] > 0)


def init_params(hidden_dim, key):
    """Per-edge-type MscnAggregator weights: Linear(2H -> H), split into
    (w_self, w_msg) padded to (HP, HP) and pre-cast to bf16 for the MXU."""
    assert hidden_dim <= HP
    params = {}
    for i, (_, etype, _) in enumerate(UDF_CANONICAL_EDGE_TYPES):
        kp = jax.random.fold_in(key, i)
        w = jax.random.normal(jax.random.fold_in(kp, 0),
                              (2 * hidden_dim, hidden_dim), jnp.float32)
        w = w * (1.0 / (2 * hidden_dim) ** 0.5)
        b = jax.random.normal(jax.random.fold_in(kp, 1), (hidden_dim,),
                              jnp.float32) * 0.1
        w2 = jnp.zeros((2, HP, HP), jnp.float32)
        w2 = w2.at[0, :hidden_dim, :hidden_dim].set(w[:hidden_dim])      # self
        w2 = w2.at[1, :hidden_dim, :hidden_dim].set(w[hidden_dim:])      # msg
        b_pack = jnp.zeros((1, HP), jnp.float32).at[0, :hidden_dim].set(b)
        params[etype] = (w2.astype(jnp.bfloat16), b_pack)
    return params


def topological_mp_sweep(params, graph_edges, orig_feat_dict, depths):
    """One fused pallas_call over a depth schedule (features stay VMEM-resident
    across depths).  Returns (feat_dict, found_any_depth) with `found` as a
    DEVICE bool scalar (no host sync)."""
    w_all = jnp.stack([params[etype][0] for _, etype, _ in UDF_CANONICAL_EDGE_TYPES])
    b_all = jnp.stack([params[etype][1] for _, etype, _ in UDF_CANONICAL_EDGE_TYPES])
    edges = tuple(graph_edges[etype] for _, etype, _ in UDF_CANONICAL_EDGE_TYPES)
    feats = (orig_feat_dict["column"], orig_feat_dict["output_column"],
             orig_feat_dict["plan"])
    depth_arr = jnp.asarray(depths, jnp.int32).reshape(-1)
    new_out, new_plan, found = _fused_forward(w_all, b_all, edges, feats, depth_arr)
    feat_dict = dict(orig_feat_dict)        # feat_dict = orig_feat_dict.copy()
    feat_dict["output_column"] = new_out    # "column" is never a dst -> unchanged
    feat_dict["plan"] = new_plan
    return feat_dict, found


def topological_mp_forward(params, graph_edges, orig_feat_dict, depth, num_nodes=None):
    """Single-depth forward == the PyTorch module's forward semantics."""
    del num_nodes  # shapes are carried by the feature arrays themselves
    return topological_mp_sweep(params, graph_edges, orig_feat_dict, [depth])


def _reference_forward(params, graph_edges, feat_dict, depth, num_nodes, hidden):
    """Pure-JAX f32 reference (dense-adjacency formulation) for validation."""
    fd = dict(feat_dict)
    found = False
    for src_nt, etype, dst_nt in UDF_CANONICAL_EDGE_TYPES:
        src_ids, dst_ids, e_depth = graph_edges[etype]
        sel = (e_depth == depth)
        if not bool(jnp.any(sel)):
            continue
        found = True
        sel_f = sel.astype(jnp.float32)
        n_src, n_dst = num_nodes[src_nt], num_nodes[dst_nt]
        adj = jnp.zeros((n_dst, n_src), jnp.float32).at[dst_ids, src_ids].add(sel_f)
        ft = adj @ fd[src_nt]
        w2, b_pack = params[etype]
        w_self = w2[0, :hidden, :hidden].astype(jnp.float32)
        w_msg = w2[1, :hidden, :hidden].astype(jnp.float32)
        b = b_pack[0:1, :hidden]
        z = fd[dst_nt] @ w_self + ft @ w_msg + b
        res = jnp.where(z > 0, z, 0.01 * z)
        mask = jnp.zeros((n_dst,), jnp.float32).at[dst_ids].max(sel_f).reshape(-1, 1)
        fd[dst_nt] = jnp.where(mask > 0, res, fd[dst_nt])
    return fd, found


def _check_close(name, got, ref):
    err = float(jnp.max(jnp.abs(got - ref)))
    tol = 0.05 + 0.02 * float(jnp.max(jnp.abs(ref)))   # bf16 MXU operands
    assert err < tol, f"{name}: max abs err {err} (tol {tol})"


if __name__ == "__main__":
    key = jax.random.PRNGKey(0)
    k_feat, k_param, k_edge = jax.random.split(key, 3)

    hidden = 32
    num_nodes = {"column": 16, "output_column": 16, "plan": 16}

    # Node features per node type: (num_nodes, hidden) float32
    feat_dict = {}
    for i, (nt, n) in enumerate(num_nodes.items()):
        feat_dict[nt] = jax.random.normal(jax.random.fold_in(k_feat, i),
                                          (n, hidden), jnp.float32)

    # Synthetic heterogeneous graph: per edge type, src/dst node ids and edge depth.
    graph_edges = {}
    n_edges = 24
    for i, (src_nt, etype, dst_nt) in enumerate(UDF_CANONICAL_EDGE_TYPES):
        ke = jax.random.fold_in(k_edge, i)
        src_ids = jax.random.randint(jax.random.fold_in(ke, 0), (n_edges,), 0,
                                     num_nodes[src_nt], dtype=jnp.int32)
        dst_ids = jax.random.randint(jax.random.fold_in(ke, 1), (n_edges,), 0,
                                     num_nodes[dst_nt], dtype=jnp.int32)
        e_depth = jax.random.randint(jax.random.fold_in(ke, 2), (n_edges,), 0, 3,
                                     dtype=jnp.int32)
        graph_edges[etype] = (src_ids, dst_ids, e_depth)

    params = init_params(hidden, k_param)

    # --- single-depth forward (module semantics) ---
    out_dict, found = topological_mp_forward(params, graph_edges, feat_dict,
                                             depth=1, num_nodes=num_nodes)
    for v in out_dict.values():
        jax.block_until_ready(v)
    jax.block_until_ready(found)

    ref_dict, ref_found = _reference_forward(params, graph_edges, feat_dict,
                                             depth=1, num_nodes=num_nodes,
                                             hidden=hidden)
    for nt in ("column", "output_column", "plan"):
        _check_close(nt, out_dict[nt], ref_dict[nt])
    assert bool(found) == ref_found

    # --- fused multi-depth sweep: ONE pallas_call over depths [0,1,2] ---
    sweep_dict, sweep_found = topological_mp_sweep(params, graph_edges, feat_dict,
                                                   [0, 1, 2])
    for v in sweep_dict.values():
        jax.block_until_ready(v)
    jax.block_until_ready(sweep_found)

    ref_fd, ref_any = dict(feat_dict), False
    for d in (0, 1, 2):
        ref_fd, f = _reference_forward(params, graph_edges, ref_fd, d,
                                       num_nodes, hidden)
        ref_any = ref_any or f
    for nt in ("column", "output_column", "plan"):
        _check_close(f"sweep/{nt}", sweep_dict[nt], ref_fd[nt])
    assert bool(sweep_found) == ref_any

    print("KERNEL_OK")
</pallas_src>

<mosaic_0001>
module attributes {stable_mosaic.version = 11 : i64} {
  func.func @_fused_topo_mp_kernel(%arg0: i32, %arg1: memref<1xi32, #tpu.memory_space<smem>>, %arg2: memref<3x128xi32, #tpu.memory_space<vmem>>, %arg3: memref<3x128xi32, #tpu.memory_space<vmem>>, %arg4: memref<3x128xi32, #tpu.memory_space<vmem>>, %arg5: memref<16x128xf32, #tpu.memory_space<vmem>>, %arg6: memref<16x128xf32, #tpu.memory_space<vmem>>, %arg7: memref<16x128xf32, #tpu.memory_space<vmem>>, %arg8: memref<3x2x128x128xbf16, #tpu.memory_space<vmem>>, %arg9: memref<3x1x128xf32, #tpu.memory_space<vmem>>, %arg10: memref<16x128xf32, #tpu.memory_space<vmem>>, %arg11: memref<16x128xf32, #tpu.memory_space<vmem>>, %arg12: memref<1x1xi32, #tpu.memory_space<vmem>>) attributes {dimension_semantics = [#tpu.dimension_semantics<arbitrary>], iteration_bounds = array<i64: 1>, scalar_prefetch = 1 : i64, scratch_operands = 0 : i64, tpu.core_type = #tpu.core_type<tc>, window_params = [{pipeline_mode = #tpu.pipeline_mode<synchronous>, transform_indices = @transform_0, window_bounds = array<i64: 3, 128>}, {pipeline_mode = #tpu.pipeline_mode<synchronous>, transform_indices = @transform_1, window_bounds = array<i64: 3, 128>}, {pipeline_mode = #tpu.pipeline_mode<synchronous>, transform_indices = @transform_2, window_bounds = array<i64: 3, 128>}, {pipeline_mode = #tpu.pipeline_mode<synchronous>, transform_indices = @transform_3, window_bounds = array<i64: 16, 128>}, {pipeline_mode = #tpu.pipeline_mode<synchronous>, transform_indices = @transform_4, window_bounds = array<i64: 16, 128>}, {pipeline_mode = #tpu.pipeline_mode<synchronous>, transform_indices = @transform_5, window_bounds = array<i64: 16, 128>}, {pipeline_mode = #tpu.pipeline_mode<synchronous>, transform_indices = @transform_6, window_bounds = array<i64: 3, 2, 128, 128>}, {pipeline_mode = #tpu.pipeline_mode<synchronous>, transform_indices = @transform_7, window_bounds = array<i64: 3, 1, 128>}, {pipeline_mode = #tpu.pipeline_mode<synchronous>, transform_indices = @transform_8, window_bounds = array<i64: 16, 128>}, {pipeline_mode = #tpu.pipeline_mode<synchronous>, transform_indices = @transform_9, window_bounds = array<i64: 16, 128>}, {pipeline_mode = #tpu.pipeline_mode<synchronous>, transform_indices = @transform_10, window_bounds = array<i64: 1, 1>}]} {
    %0 = arith.index_cast %arg0 : i32 to index
    %1 = memref.load %arg1[%0] : memref<1xi32, #tpu.memory_space<smem>>
    %c0_i32 = arith.constant 0 : i32
    %2 = arith.cmpi eq, %arg0, %c0_i32 : i32
    %3 = arith.extui %2 : i1 to i32
    %c0_i32_0 = arith.constant 0 : i32
    %4 = arith.cmpi ne, %3, %c0_i32_0 : i32
    scf.if %4 {
      %c0_92 = arith.constant 0 : index
      %c0_93 = arith.constant 0 : index
      %178 = vector.load %arg6[%c0_92, %c0_93] : memref<16x128xf32, #tpu.memory_space<vmem>>, vector<16x128xf32>
      %c0_94 = arith.constant 0 : index
      %c0_95 = arith.constant 0 : index
      %179 = vector.load %arg10[%c0_94, %c0_95] : memref<16x128xf32, #tpu.memory_space<vmem>>, vector<16x128xf32>
      tpu.vector_store %arg10[%c0_94, %c0_95], %178 {strides = array<i32>} : memref<16x128xf32, #tpu.memory_space<vmem>>, vector<16x128xf32>,
      %c0_96 = arith.constant 0 : index
      %c0_97 = arith.constant 0 : index
      %180 = vector.load %arg7[%c0_96, %c0_97] : memref<16x128xf32, #tpu.memory_space<vmem>>, vector<16x128xf32>
      %c0_98 = arith.constant 0 : index
      %c0_99 = arith.constant 0 : index
      %181 = vector.load %arg11[%c0_98, %c0_99] : memref<16x128xf32, #tpu.memory_space<vmem>>, vector<16x128xf32>
      tpu.vector_store %arg11[%c0_98, %c0_99], %180 {strides = array<i32>} : memref<16x128xf32, #tpu.memory_space<vmem>>, vector<16x128xf32>,
      %c0_i32_100 = arith.constant 0 : i32
      %182 = vector.broadcast %c0_i32_100 : i32 to vector<1x1xi32>
      %c0_101 = arith.constant 0 : index
      %c0_102 = arith.constant 0 : index
      %183 = vector.load %arg12[%c0_101, %c0_102] : memref<1x1xi32, #tpu.memory_space<vmem>>, vector<1x1xi32>
      tpu.vector_store %arg12[%c0_101, %c0_102], %182 {strides = array<i32>} : memref<1x1xi32, #tpu.memory_space<vmem>>, vector<1x1xi32>,
    } else {
    }
    %c0 = arith.constant 0 : index
    %c0_1 = arith.constant 0 : index
    %5 = vector.load %arg5[%c0, %c0_1] : memref<16x128xf32, #tpu.memory_space<vmem>>, vector<16x128xf32>
    %c0_2 = arith.constant 0 : index
    %c0_3 = arith.constant 0 : index
    %6 = vector.load %arg10[%c0_2, %c0_3] : memref<16x128xf32, #tpu.memory_space<vmem>>, vector<16x128xf32>
    %c0_4 = arith.constant 0 : index
    %c0_5 = arith.constant 0 : index
    %7 = vector.load %arg11[%c0_4, %c0_5] : memref<16x128xf32, #tpu.memory_space<vmem>>, vector<16x128xf32>
    %c0_6 = arith.constant 0 : index
    %c0_7 = arith.constant 0 : index
    %8 = vector.load %arg2[%c0_6, %c0_7] : memref<3x128xi32, #tpu.memory_space<vmem>>, vector<1x128xi32>
    %c1 = arith.constant 1 : index
    %c0_8 = arith.constant 0 : index
    %9 = vector.load %arg2[%c1, %c0_8] : memref<3x128xi32, #tpu.memory_space<vmem>>, vector<1x128xi32>
    %c2 = arith.constant 2 : index
    %c0_9 = arith.constant 0 : index
    %10 = vector.load %arg2[%c2, %c0_9] : memref<3x128xi32, #tpu.memory_space<vmem>>, vector<1x128xi32>
    %11 = vector.broadcast %1 : i32 to vector<1x128xi32>
    %12 = arith.cmpi eq, %9, %11 : vector<1x128xi32>
    %13 = tpu.iota {dimensions = array<i32: 0>} : vector<16x128xi32>
    %14 = vector.broadcast %8 : vector<1x128xi32> to vector<16x128xi32>
    %15 = arith.cmpi eq, %13, %14 : vector<16x128xi32>
    %16 = vector.broadcast %12 : vector<1x128xi1> to vector<16x128xi1>
    %17 = arith.andi %15, %16 : vector<16x128xi1>
    %18 = arith.extui %17 : vector<16x128xi1> to vector<16x128xi32>
    %19 = arith.sitofp %18 : vector<16x128xi32> to vector<16x128xf32>
    %20 = arith.truncf %19 : vector<16x128xf32> to vector<16x128xbf16>
    %21 = tpu.iota {dimensions = array<i32: 0>} : vector<16x128xi32>
    %22 = vector.broadcast %10 : vector<1x128xi32> to vector<16x128xi32>
    %23 = arith.cmpi eq, %21, %22 : vector<16x128xi32>
    %24 = arith.extui %23 : vector<16x128xi1> to vector<16x128xi32>
    %25 = arith.sitofp %24 : vector<16x128xi32> to vector<16x128xf32>
    %26 = arith.truncf %25 : vector<16x128xf32> to vector<16x128xbf16>
    %cst = arith.constant dense<0.000000e+00> : vector<16x16xf32>
    %27 = tpu.matmul %20, %26, %cst {dimension_numbers = #tpu.dot_dimension_numbers<[1], [1], [0], [0], [0, 0, 1, 0], [], []>} : vector<16x128xbf16>, vector<16x128xbf16>, vector<16x16xf32> -> vector<16x16xf32>
    %28 = arith.truncf %27 : vector<16x16xf32> to vector<16x16xbf16>
    %29 = arith.truncf %5 : vector<16x128xf32> to vector<16x128xbf16>
    %cst_10 = arith.constant dense<0.000000e+00> : vector<16x128xf32>
    %30 = tpu.matmul %28, %29, %cst_10 {dimension_numbers = #tpu.dot_dimension_numbers<[1], [0], [0], [1], [0, 0, 1, 1], [], []>} : vector<16x16xbf16>, vector<16x128xbf16>, vector<16x128xf32> -> vector<16x128xf32>
    %cst_11 = arith.constant dense<0.000000e+00> : vector<16xf32>
    %31 = vector.multi_reduction <add>, %27, %cst_11 [1] : vector<16x16xf32> to vector<16xf32>
    %32 = vector.shape_cast %31 : vector<16xf32> to vector<16x1xf32>
    %cst_12 = arith.constant 0.000000e+00 : f32
    %33 = vector.broadcast %cst_12 : f32 to vector<16x1xf32>
    %34 = arith.cmpf ogt, %32, %33 : vector<16x1xf32>
    %35 = arith.extui %12 : vector<1x128xi1> to vector<1x128xi32>
    %36 = arith.sitofp %35 : vector<1x128xi32> to vector<1x128xf32>
    %cst_13 = arith.constant dense<0.000000e+00> : vector<1xf32>
    %37 = vector.multi_reduction <add>, %36, %cst_13 [1] : vector<1x128xf32> to vector<1xf32>
    %38 = vector.shape_cast %37 : vector<1xf32> to vector<1x1xf32>
    %cst_14 = arith.constant 0.000000e+00 : f32
    %39 = vector.broadcast %cst_14 : f32 to vector<1x1xf32>
    %40 = arith.cmpf ogt, %38, %39 : vector<1x1xf32>
    %41 = arith.truncf %6 : vector<16x128xf32> to vector<16x128xbf16>
    %c0_15 = arith.constant 0 : index
    %c0_16 = arith.constant 0 : index
    %c0_17 = arith.constant 0 : index
    %c0_18 = arith.constant 0 : index
    %42 = vector.load %arg8[%c0_15, %c0_16, %c0_17, %c0_18] : memref<3x2x128x128xbf16, #tpu.memory_space<vmem>>, vector<1x1x128x128xbf16>
    %43 = vector.shape_cast %42 : vector<1x1x128x128xbf16> to vector<128x128xbf16>
    %cst_19 = arith.constant dense<0.000000e+00> : vector<16x128xf32>
    %44 = tpu.matmul %41, %43, %cst_19 {dimension_numbers = #tpu.dot_dimension_numbers<[1], [0], [0], [1], [0, 0, 1, 1], [], []>} : vector<16x128xbf16>, vector<128x128xbf16>, vector<16x128xf32> -> vector<16x128xf32>
    %45 = arith.truncf %30 : vector<16x128xf32> to vector<16x128xbf16>
    %c0_20 = arith.constant 0 : index
    %c1_21 = arith.constant 1 : index
    %c0_22 = arith.constant 0 : index
    %c0_23 = arith.constant 0 : index
    %46 = vector.load %arg8[%c0_20, %c1_21, %c0_22, %c0_23] : memref<3x2x128x128xbf16, #tpu.memory_space<vmem>>, vector<1x1x128x128xbf16>
    %47 = vector.shape_cast %46 : vector<1x1x128x128xbf16> to vector<128x128xbf16>
    %cst_24 = arith.constant dense<0.000000e+00> : vector<16x128xf32>
    %48 = tpu.matmul %45, %47, %cst_24 {dimension_numbers = #tpu.dot_dimension_numbers<[1], [0], [0], [1], [0, 0, 1, 1], [], []>} : vector<16x128xbf16>, vector<128x128xbf16>, vector<16x128xf32> -> vector<16x128xf32>
    %49 = arith.addf %44, %48 : vector<16x128xf32>
    %c0_25 = arith.constant 0 : index
    %c0_26 = arith.constant 0 : index
    %c0_27 = arith.constant 0 : index
    %50 = vector.load %arg9[%c0_25, %c0_26, %c0_27] : memref<3x1x128xf32, #tpu.memory_space<vmem>>, vector<1x1x128xf32>
    %51 = vector.shape_cast %50 : vector<1x1x128xf32> to vector<1x128xf32>
    %52 = vector.broadcast %51 : vector<1x128xf32> to vector<16x128xf32>
    %53 = arith.addf %49, %52 : vector<16x128xf32>
    %cst_28 = arith.constant 0.000000e+00 : f32
    %54 = vector.broadcast %cst_28 : f32 to vector<16x128xf32>
    %55 = arith.cmpf ogt, %53, %54 : vector<16x128xf32>
    %cst_29 = arith.constant 0.00999999977 : f32
    %56 = vector.broadcast %cst_29 : f32 to vector<16x128xf32>
    %57 = arith.mulf %56, %53 : vector<16x128xf32>
    %58 = arith.select %55, %53, %57 : vector<16x128xi1>, vector<16x128xf32>
    %59 = vector.shape_cast %34 : vector<16x1xi1> to vector<16x1xi1>
    %60 = vector.broadcast %59 : vector<16x1xi1> to vector<16x128xi1>
    %61 = arith.select %60, %58, %6 : vector<16x128xi1>, vector<16x128xf32>
    %c0_30 = arith.constant 0 : index
    %c0_31 = arith.constant 0 : index
    %62 = vector.load %arg3[%c0_30, %c0_31] : memref<3x128xi32, #tpu.memory_space<vmem>>, vector<1x128xi32>
    %c1_32 = arith.constant 1 : index
    %c0_33 = arith.constant 0 : index
    %63 = vector.load %arg3[%c1_32, %c0_33] : memref<3x128xi32, #tpu.memory_space<vmem>>, vector<1x128xi32>
    %c2_34 = arith.constant 2 : index
    %c0_35 = arith.constant 0 : index
    %64 = vector.load %arg3[%c2_34, %c0_35] : memref<3x128xi32, #tpu.memory_space<vmem>>, vector<1x128xi32>
    %65 = vector.broadcast %1 : i32 to vector<1x128xi32>
    %66 = arith.cmpi eq, %63, %65 : vector<1x128xi32>
    %67 = tpu.iota {dimensions = array<i32: 0>} : vector<16x128xi32>
    %68 = vector.broadcast %62 : vector<1x128xi32> to vector<16x128xi32>
    %69 = arith.cmpi eq, %67, %68 : vector<16x128xi32>
    %70 = vector.broadcast %66 : vector<1x128xi1> to vector<16x128xi1>
    %71 = arith.andi %69, %70 : vector<16x128xi1>
    %72 = arith.extui %71 : vector<16x128xi1> to vector<16x128xi32>
    %73 = arith.sitofp %72 : vector<16x128xi32> to vector<16x128xf32>
    %74 = arith.truncf %73 : vector<16x128xf32> to vector<16x128xbf16>
    %75 = tpu.iota {dimensions = array<i32: 0>} : vector<16x128xi32>
    %76 = vector.broadcast %64 : vector<1x128xi32> to vector<16x128xi32>
    %77 = arith.cmpi eq, %75, %76 : vector<16x128xi32>
    %78 = arith.extui %77 : vector<16x128xi1> to vector<16x128xi32>
    %79 = arith.sitofp %78 : vector<16x128xi32> to vector<16x128xf32>
    %80 = arith.truncf %79 : vector<16x128xf32> to vector<16x128xbf16>
    %cst_36 = arith.constant dense<0.000000e+00> : vector<16x16xf32>
    %81 = tpu.matmul %74, %80, %cst_36 {dimension_numbers = #tpu.dot_dimension_numbers<[1], [1], [0], [0], [0, 0, 1, 0], [], []>} : vector<16x128xbf16>, vector<16x128xbf16>, vector<16x16xf32> -> vector<16x16xf32>
    %82 = arith.truncf %81 : vector<16x16xf32> to vector<16x16xbf16>
    %83 = arith.truncf %61 : vector<16x128xf32> to vector<16x128xbf16>
    %cst_37 = arith.constant dense<0.000000e+00> : vector<16x128xf32>
    %84 = tpu.matmul %82, %83, %cst_37 {dimension_numbers = #tpu.dot_dimension_numbers<[1], [0], [0], [1], [0, 0, 1, 1], [], []>} : vector<16x16xbf16>, vector<16x128xbf16>, vector<16x128xf32> -> vector<16x128xf32>
    %cst_38 = arith.constant dense<0.000000e+00> : vector<16xf32>
    %85 = vector.multi_reduction <add>, %81, %cst_38 [1] : vector<16x16xf32> to vector<16xf32>
    %86 = vector.shape_cast %85 : vector<16xf32> to vector<16x1xf32>
    %cst_39 = arith.constant 0.000000e+00 : f32
    %87 = vector.broadcast %cst_39 : f32 to vector<16x1xf32>
    %88 = arith.cmpf ogt, %86, %87 : vector<16x1xf32>
    %89 = arith.extui %66 : vector<1x128xi1> to vector<1x128xi32>
    %90 = arith.sitofp %89 : vector<1x128xi32> to vector<1x128xf32>
    %cst_40 = arith.constant dense<0.000000e+00> : vector<1xf32>
    %91 = vector.multi_reduction <add>, %90, %cst_40 [1] : vector<1x128xf32> to vector<1xf32>
    %92 = vector.shape_cast %91 : vector<1xf32> to vector<1x1xf32>
    %cst_41 = arith.constant 0.000000e+00 : f32
    %93 = vector.broadcast %cst_41 : f32 to vector<1x1xf32>
    %94 = arith.cmpf ogt, %92, %93 : vector<1x1xf32>
    %95 = arith.truncf %7 : vector<16x128xf32> to vector<16x128xbf16>
    %c1_42 = arith.constant 1 : index
    %c0_43 = arith.constant 0 : index
    %c0_44 = arith.constant 0 : index
    %c0_45 = arith.constant 0 : index
    %96 = vector.load %arg8[%c1_42, %c0_43, %c0_44, %c0_45] : memref<3x2x128x128xbf16, #tpu.memory_space<vmem>>, vector<1x1x128x128xbf16>
    %97 = vector.shape_cast %96 : vector<1x1x128x128xbf16> to vector<128x128xbf16>
    %cst_46 = arith.constant dense<0.000000e+00> : vector<16x128xf32>
    %98 = tpu.matmul %95, %97, %cst_46 {dimension_numbers = #tpu.dot_dimension_numbers<[1], [0], [0], [1], [0, 0, 1, 1], [], []>} : vector<16x128xbf16>, vector<128x128xbf16>, vector<16x128xf32> -> vector<16x128xf32>
    %99 = arith.truncf %84 : vector<16x128xf32> to vector<16x128xbf16>
    %c1_47 = arith.constant 1 : index
    %c1_48 = arith.constant 1 : index
    %c0_49 = arith.constant 0 : index
    %c0_50 = arith.constant 0 : index
    %100 = vector.load %arg8[%c1_47, %c1_48, %c0_49, %c0_50] : memref<3x2x128x128xbf16, #tpu.memory_space<vmem>>, vector<1x1x128x128xbf16>
    %101 = vector.shape_cast %100 : vector<1x1x128x128xbf16> to vector<128x128xbf16>
    %cst_51 = arith.constant dense<0.000000e+00> : vector<16x128xf32>
    %102 = tpu.matmul %99, %101, %cst_51 {dimension_numbers = #tpu.dot_dimension_numbers<[1], [0], [0], [1], [0, 0, 1, 1], [], []>} : vector<16x128xbf16>, vector<128x128xbf16>, vector<16x128xf32> -> vector<16x128xf32>
    %103 = arith.addf %98, %102 : vector<16x128xf32>
    %c1_52 = arith.constant 1 : index
    %c0_53 = arith.constant 0 : index
    %c0_54 = arith.constant 0 : index
    %104 = vector.load %arg9[%c1_52, %c0_53, %c0_54] : memref<3x1x128xf32, #tpu.memory_space<vmem>>, vector<1x1x128xf32>
    %105 = vector.shape_cast %104 : vector<1x1x128xf32> to vector<1x128xf32>
    %106 = vector.broadcast %105 : vector<1x128xf32> to vector<16x128xf32>
    %107 = arith.addf %103, %106 : vector<16x128xf32>
    %cst_55 = arith.constant 0.000000e+00 : f32
    %108 = vector.broadcast %cst_55 : f32 to vector<16x128xf32>
    %109 = arith.cmpf ogt, %107, %108 : vector<16x128xf32>
    %cst_56 = arith.constant 0.00999999977 : f32
    %110 = vector.broadcast %cst_56 : f32 to vector<16x128xf32>
    %111 = arith.mulf %110, %107 : vector<16x128xf32>
    %112 = arith.select %109, %107, %111 : vector<16x128xi1>, vector<16x128xf32>
    %113 = vector.shape_cast %88 : vector<16x1xi1> to vector<16x1xi1>
    %114 = vector.broadcast %113 : vector<16x1xi1> to vector<16x128xi1>
    %115 = arith.select %114, %112, %7 : vector<16x128xi1>, vector<16x128xf32>
    %c0_57 = arith.constant 0 : index
    %c0_58 = arith.constant 0 : index
    %116 = vector.load %arg4[%c0_57, %c0_58] : memref<3x128xi32, #tpu.memory_space<vmem>>, vector<1x128xi32>
    %c1_59 = arith.constant 1 : index
    %c0_60 = arith.constant 0 : index
    %117 = vector.load %arg4[%c1_59, %c0_60] : memref<3x128xi32, #tpu.memory_space<vmem>>, vector<1x128xi32>
    %c2_61 = arith.constant 2 : index
    %c0_62 = arith.constant 0 : index
    %118 = vector.load %arg4[%c2_61, %c0_62] : memref<3x128xi32, #tpu.memory_space<vmem>>, vector<1x128xi32>
    %119 = vector.broadcast %1 : i32 to vector<1x128xi32>
    %120 = arith.cmpi eq, %117, %119 : vector<1x128xi32>
    %121 = tpu.iota {dimensions = array<i32: 0>} : vector<16x128xi32>
    %122 = vector.broadcast %116 : vector<1x128xi32> to vector<16x128xi32>
    %123 = arith.cmpi eq, %121, %122 : vector<16x128xi32>
    %124 = vector.broadcast %120 : vector<1x128xi1> to vector<16x128xi1>
    %125 = arith.andi %123, %124 : vector<16x128xi1>
    %126 = arith.extui %125 : vector<16x128xi1> to vector<16x128xi32>
    %127 = arith.sitofp %126 : vector<16x128xi32> to vector<16x128xf32>
    %128 = arith.truncf %127 : vector<16x128xf32> to vector<16x128xbf16>
    %129 = tpu.iota {dimensions = array<i32: 0>} : vector<16x128xi32>
    %130 = vector.broadcast %118 : vector<1x128xi32> to vector<16x128xi32>
    %131 = arith.cmpi eq, %129, %130 : vector<16x128xi32>
    %132 = arith.extui %131 : vector<16x128xi1> to vector<16x128xi32>
    %133 = arith.sitofp %132 : vector<16x128xi32> to vector<16x128xf32>
    %134 = arith.truncf %133 : vector<16x128xf32> to vector<16x128xbf16>
    %cst_63 = arith.constant dense<0.000000e+00> : vector<16x16xf32>
    %135 = tpu.matmul %128, %134, %cst_63 {dimension_numbers = #tpu.dot_dimension_numbers<[1], [1], [0], [0], [0, 0, 1, 0], [], []>} : vector<16x128xbf16>, vector<16x128xbf16>, vector<16x16xf32> -> vector<16x16xf32>
    %136 = arith.truncf %135 : vector<16x16xf32> to vector<16x16xbf16>
    %137 = arith.truncf %115 : vector<16x128xf32> to vector<16x128xbf16>
    %cst_64 = arith.constant dense<0.000000e+00> : vector<16x128xf32>
    %138 = tpu.matmul %136, %137, %cst_64 {dimension_numbers = #tpu.dot_dimension_numbers<[1], [0], [0], [1], [0, 0, 1, 1], [], []>} : vector<16x16xbf16>, vector<16x128xbf16>, vector<16x128xf32> -> vector<16x128xf32>
    %cst_65 = arith.constant dense<0.000000e+00> : vector<16xf32>
    %139 = vector.multi_reduction <add>, %135, %cst_65 [1] : vector<16x16xf32> to vector<16xf32>
    %140 = vector.shape_cast %139 : vector<16xf32> to vector<16x1xf32>
    %cst_66 = arith.constant 0.000000e+00 : f32
    %141 = vector.broadcast %cst_66 : f32 to vector<16x1xf32>
    %142 = arith.cmpf ogt, %140, %141 : vector<16x1xf32>
    %143 = arith.extui %120 : vector<1x128xi1> to vector<1x128xi32>
    %144 = arith.sitofp %143 : vector<1x128xi32> to vector<1x128xf32>
    %cst_67 = arith.constant dense<0.000000e+00> : vector<1xf32>
    %145 = vector.multi_reduction <add>, %144, %cst_67 [1] : vector<1x128xf32> to vector<1xf32>
    %146 = vector.shape_cast %145 : vector<1xf32> to vector<1x1xf32>
    %cst_68 = arith.constant 0.000000e+00 : f32
    %147 = vector.broadcast %cst_68 : f32 to vector<1x1xf32>
    %148 = arith.cmpf ogt, %146, %147 : vector<1x1xf32>
    %149 = arith.truncf %115 : vector<16x128xf32> to vector<16x128xbf16>
    %c2_69 = arith.constant 2 : index
    %c0_70 = arith.constant 0 : index
    %c0_71 = arith.constant 0 : index
    %c0_72 = arith.constant 0 : index
    %150 = vector.load %arg8[%c2_69, %c0_70, %c0_71, %c0_72] : memref<3x2x128x128xbf16, #tpu.memory_space<vmem>>, vector<1x1x128x128xbf16>
    %151 = vector.shape_cast %150 : vector<1x1x128x128xbf16> to vector<128x128xbf16>
    %cst_73 = arith.constant dense<0.000000e+00> : vector<16x128xf32>
    %152 = tpu.matmul %149, %151, %cst_73 {dimension_numbers = #tpu.dot_dimension_numbers<[1], [0], [0], [1], [0, 0, 1, 1], [], []>} : vector<16x128xbf16>, vector<128x128xbf16>, vector<16x128xf32> -> vector<16x128xf32>
    %153 = arith.truncf %138 : vector<16x128xf32> to vector<16x128xbf16>
    %c2_74 = arith.constant 2 : index
    %c1_75 = arith.constant 1 : index
    %c0_76 = arith.constant 0 : index
    %c0_77 = arith.constant 0 : index
    %154 = vector.load %arg8[%c2_74, %c1_75, %c0_76, %c0_77] : memref<3x2x128x128xbf16, #tpu.memory_space<vmem>>, vector<1x1x128x128xbf16>
    %155 = vector.shape_cast %154 : vector<1x1x128x128xbf16> to vector<128x128xbf16>
    %cst_78 = arith.constant dense<0.000000e+00> : vector<16x128xf32>
    %156 = tpu.matmul %153, %155, %cst_78 {dimension_numbers = #tpu.dot_dimension_numbers<[1], [0], [0], [1], [0, 0, 1, 1], [], []>} : vector<16x128xbf16>, vector<128x128xbf16>, vector<16x128xf32> -> vector<16x128xf32>
    %157 = arith.addf %152, %156 : vector<16x128xf32>
    %c2_79 = arith.constant 2 : index
    %c0_80 = arith.constant 0 : index
    %c0_81 = arith.constant 0 : index
    %158 = vector.load %arg9[%c2_79, %c0_80, %c0_81] : memref<3x1x128xf32, #tpu.memory_space<vmem>>, vector<1x1x128xf32>
    %159 = vector.shape_cast %158 : vector<1x1x128xf32> to vector<1x128xf32>
    %160 = vector.broadcast %159 : vector<1x128xf32> to vector<16x128xf32>
    %161 = arith.addf %157, %160 : vector<16x128xf32>
    %cst_82 = arith.constant 0.000000e+00 : f32
    %162 = vector.broadcast %cst_82 : f32 to vector<16x128xf32>
    %163 = arith.cmpf ogt, %161, %162 : vector<16x128xf32>
    %cst_83 = arith.constant 0.00999999977 : f32
    %164 = vector.broadcast %cst_83 : f32 to vector<16x128xf32>
    %165 = arith.mulf %164, %161 : vector<16x128xf32>
    %166 = arith.select %163, %161, %165 : vector<16x128xi1>, vector<16x128xf32>
    %167 = vector.shape_cast %142 : vector<16x1xi1> to vector<16x1xi1>
    %168 = vector.broadcast %167 : vector<16x1xi1> to vector<16x128xi1>
    %169 = arith.select %168, %166, %115 : vector<16x128xi1>, vector<16x128xf32>
    %c0_84 = arith.constant 0 : index
    %c0_85 = arith.constant 0 : index
    %170 = vector.load %arg10[%c0_84, %c0_85] : memref<16x128xf32, #tpu.memory_space<vmem>>, vector<16x128xf32>
    tpu.vector_store %arg10[%c0_84, %c0_85], %61 {strides = array<i32>} : memref<16x128xf32, #tpu.memory_space<vmem>>, vector<16x128xf32>,
    %c0_86 = arith.constant 0 : index
    %c0_87 = arith.constant 0 : index
    %171 = vector.load %arg11[%c0_86, %c0_87] : memref<16x128xf32, #tpu.memory_space<vmem>>, vector<16x128xf32>
    tpu.vector_store %arg11[%c0_86, %c0_87], %169 {strides = array<i32>} : memref<16x128xf32, #tpu.memory_space<vmem>>, vector<16x128xf32>,
    %172 = arith.ori %40, %94 : vector<1x1xi1>
    %173 = arith.ori %172, %148 : vector<1x1xi1>
    %174 = arith.extui %173 : vector<1x1xi1> to vector<1x1xi32>
    %c0_88 = arith.constant 0 : index
    %c0_89 = arith.constant 0 : index
    %175 = vector.load %arg12[%c0_88, %c0_89] : memref<1x1xi32, #tpu.memory_space<vmem>>, vector<1x1xi32>
    %176 = arith.maxsi %175, %174 : vector<1x1xi32>
    %c0_90 = arith.constant 0 : index
    %c0_91 = arith.constant 0 : index
    %177 = vector.load %arg12[%c0_90, %c0_91] : memref<1x1xi32, #tpu.memory_space<vmem>>, vector<1x1xi32>
    tpu.vector_store %arg12[%c0_90, %c0_91], %176 {strides = array<i32>} : memref<1x1xi32, #tpu.memory_space<vmem>>, vector<1x1xi32>,
    return
  }
  func.func @transform_0(%arg0: i32, %arg1: memref<1xi32, #tpu.memory_space<smem>>) -> (i32, i32) {
    %c0_i32 = arith.constant 0 : i32
    %c0_i32_0 = arith.constant 0 : i32
    %c0_i32_1 = arith.constant 0 : i32
    return %c0_i32, %c0_i32_0 : i32, i32
  }
  func.func @transform_1(%arg0: i32, %arg1: memref<1xi32, #tpu.memory_space<smem>>) -> (i32, i32) {
    %c0_i32 = arith.constant 0 : i32
    %c0_i32_0 = arith.constant 0 : i32
    %c0_i32_1 = arith.constant 0 : i32
    return %c0_i32, %c0_i32_0 : i32, i32
  }
  func.func @transform_2(%arg0: i32, %arg1: memref<1xi32, #tpu.memory_space<smem>>) -> (i32, i32) {
    %c0_i32 = arith.constant 0 : i32
    %c0_i32_0 = arith.constant 0 : i32
    %c0_i32_1 = arith.constant 0 : i32
    return %c0_i32, %c0_i32_0 : i32, i32
  }
  func.func @transform_3(%arg0: i32, %arg1: memref<1xi32, #tpu.memory_space<smem>>) -> (i32, i32) {
    %c0_i32 = arith.constant 0 : i32
    %c0_i32_0 = arith.constant 0 : i32
    %c0_i32_1 = arith.constant 0 : i32
    return %c0_i32, %c0_i32_0 : i32, i32
  }
  func.func @transform_4(%arg0: i32, %arg1: memref<1xi32, #tpu.memory_space<smem>>) -> (i32, i32) {
    %c0_i32 = arith.constant 0 : i32
    %c0_i32_0 = arith.constant 0 : i32
    %c0_i32_1 = arith.constant 0 : i32
    return %c0_i32, %c0_i32_0 : i32, i32
  }
  func.func @transform_5(%arg0: i32, %arg1: memref<1xi32, #tpu.memory_space<smem>>) -> (i32, i32) {
    %c0_i32 = arith.constant 0 : i32
    %c0_i32_0 = arith.constant 0 : i32
    %c0_i32_1 = arith.constant 0 : i32
    return %c0_i32, %c0_i32_0 : i32, i32
  }
  func.func @transform_6(%arg0: i32, %arg1: memref<1xi32, #tpu.memory_space<smem>>) -> (i32, i32, i32, i32) {
    %c0_i32 = arith.constant 0 : i32
    %c0_i32_0 = arith.constant 0 : i32
    %c0_i32_1 = arith.constant 0 : i32
    %c0_i32_2 = arith.constant 0 : i32
    %c0_i32_3 = arith.constant 0 : i32
    return %c0_i32, %c0_i32_0, %c0_i32_1, %c0_i32_2 : i32, i32, i32, i32
  }
  func.func @transform_7(%arg0: i32, %arg1: memref<1xi32, #tpu.memory_space<smem>>) -> (i32, i32, i32) {
    %c0_i32 = arith.constant 0 : i32
    %c0_i32_0 = arith.constant 0 : i32
    %c0_i32_1 = arith.constant 0 : i32
    %c0_i32_2 = arith.constant 0 : i32
    return %c0_i32, %c0_i32_0, %c0_i32_1 : i32, i32, i32
  }
  func.func @transform_8(%arg0: i32, %arg1: memref<1xi32, #tpu.memory_space<smem>>) -> (i32, i32) {
    %c0_i32 = arith.constant 0 : i32
    %c0_i32_0 = arith.constant 0 : i32
    %c0_i32_1 = arith.constant 0 : i32
    return %c0_i32, %c0_i32_0 : i32, i32
  }
  func.func @transform_9(%arg0: i32, %arg1: memref<1xi32, #tpu.memory_space<smem>>) -> (i32, i32) {
    %c0_i32 = arith.constant 0 : i32
    %c0_i32_0 = arith.constant 0 : i32
    %c0_i32_1 = arith.constant 0 : i32
    return %c0_i32, %c0_i32_0 : i32, i32
  }
  func.func @transform_10(%arg0: i32, %arg1: memref<1xi32, #tpu.memory_space<smem>>) -> (i32, i32) {
    %c0_i32 = arith.constant 0 : i32
    %c0_i32_0 = arith.constant 0 : i32
    %c0_i32_1 = arith.constant 0 : i32
    return %c0_i32, %c0_i32_0 : i32, i32
  }
}

</mosaic_0001>

<llo_original>
// kernel: _fused_forward.1
$region0: #{_fused_forward.1}
  #allocation0 [shape = 'u32[]', space=smem, size = 0x4, offset = 0x4, fixed_abs, tag = 'smem constant byte address 0x4 - core index']
  #allocation1 [shape = 'u32[144,128]{1,0:T(1,128)}', space=vmem, size = 0x12000, scoped, tag = 'internal scratch']
  #allocation2 [shape = 's32[1]{0}', space=sflag, size = 0x4, scoped, tag = 'scoped memory for _fused_forward.1']
  #allocation3 [shape = 's32[1]{0:T(128)S(6)}', space=smem, size = 0x200, scoped, tag = 'prefetched SMEM operand 0']
  %s0 = inlined_call_operand.<no memory space> [shape: s32[1], index: 0, kind: input, shape index: {}]
  %s1 = inlined_call_operand.vmem [shape: s32[3,128], index: 1, kind: input, shape index: {}]
  %s2 = inlined_call_operand.vmem [shape: s32[3,128], index: 2, kind: input, shape index: {}]
  %s3 = inlined_call_operand.vmem [shape: s32[3,128], index: 3, kind: input, shape index: {}]
  %s4 = inlined_call_operand.vmem [shape: f32[16,128], index: 4, kind: input, shape index: {}]
  %s5 = inlined_call_operand.vmem [shape: f32[16,128], index: 5, kind: input, shape index: {}]
  %s6 = inlined_call_operand.vmem [shape: f32[16,128], index: 6, kind: input, shape index: {}]
  %s7 = inlined_call_operand.hbm [shape: bf16[3,2,128,128], index: 7, kind: input, shape index: {}]
  %s8 = inlined_call_operand.vmem [shape: f32[3,1,128], index: 8, kind: input, shape index: {}]
  %s9 = inlined_call_operand.hbm [shape: f32[16,128], index: 9, kind: output, shape index: {0}]
  %s10 = inlined_call_operand.hbm [shape: f32[16,128], index: 10, kind: output, shape index: {1}]
  %s11 = inlined_call_operand.hbm [shape: s32[1,1], index: 11, kind: output, shape index: {2}]
  %12 = xla_tuple %s9, %s10, %s11
  %s13 = sld [smem:[#allocation0]]
  $region66: #{_fused_forward.1} parent=0
    _
  %s15 = ssub.s32 1, %s13
  %s16 = scalar_select 0, %s15, %s13
  %17 = sst [smem:[#allocation3]] %s0
  $region1: #{_fused_forward.1} parent=0
    #allocation4 [shape = 'u8[196608]{0}', space=vmem, size = 0x30000, scoped, tag = 'input window, operand 7, single buffered']
    #allocation5 [shape = 's32[1]{0}', space=sflag, size = 0x4, scoped, tag = 'scoped memory for _fused_forward.1']
    #allocation6 [shape = 's32[1]{0}', space=sflag, size = 0x4, scoped, tag = 'scoped memory for _fused_forward.1']
    #allocation7 [shape = 'u8[8192]{0}', space=vmem, size = 0x2000, scoped, tag = 'output window, operand 0, single buffered']
    #allocation8 [shape = 'u8[8192]{0}', space=vmem, size = 0x2000, scoped, tag = 'output window, operand 1, single buffered']
    #allocation9 [shape = 's32[1]{0}', space=sflag, size = 0x4, scoped, tag = 'scoped memory for _fused_forward.1']
    #allocation10 [shape = 'u8[512]{0}', space=vmem, size = 0x400, scoped, tag = 'output window, operand 2, single buffered']
    %18 = vsyncpa [#allocation5], 0
    %19 = vsyncpa [#allocation6], 0
    %20 = vsyncpa [#allocation9], 0
    // Predicated region
    $region2: #{_fused_forward.1} parent=1 // pred_check
      _
    $region3: #{_fused_forward.1} parent=1 // pred_check_branch
      %22 = sbr.rel (0) target = $region5
    $region4: #{_fused_forward.1} parent=1 // pred_region
      _
    $region5: #{_fused_forward.1} parent=1 // pred_fallthru
      _
    // Predicated region
    $region6: #{_fused_forward.1} parent=1 // pred_check
      _
    $region7: #{_fused_forward.1} parent=1 // pred_check_branch
      %24 = sbr.rel (0) target = $region9
    $region8: #{_fused_forward.1} parent=1 // pred_region
      _
    $region9: #{_fused_forward.1} parent=1 // pred_fallthru
      _
    // Predicated region
    $region10: #{_fused_forward.1} parent=1 // pred_check
      _
    $region11: #{_fused_forward.1} parent=1 // pred_check_branch
      %26 = sbr.rel (0) target = $region13
    $region12: #{_fused_forward.1} parent=1 // pred_region
      _
    $region13: #{_fused_forward.1} parent=1 // pred_fallthru
      _
    // Predicated region
    $region14: #{_fused_forward.1} parent=1 // pred_check
      _
    $region15: #{_fused_forward.1} parent=1 // pred_check_branch
      %28 = sbr.rel (0) target = $region17
    $region16: #{_fused_forward.1} parent=1 // pred_region
      _
    $region17: #{_fused_forward.1} parent=1 // pred_fallthru
      _
    // Predicated region
    $region18: #{_fused_forward.1} parent=1 // pred_check
      _
    $region19: #{_fused_forward.1} parent=1 // pred_check_branch
      %30 = sbr.rel (0) target = $region21
    $region20: #{_fused_forward.1} parent=1 // pred_region
      _
    $region21: #{_fused_forward.1} parent=1 // pred_fallthru
      _
    // Predicated region
    $region22: #{_fused_forward.1} parent=1 // pred_check
      _
    $region23: #{_fused_forward.1} parent=1 // pred_check_branch
      %32 = sbr.rel (0) target = $region25
    $region24: #{_fused_forward.1} parent=1 // pred_region
      _
    $region25: #{_fused_forward.1} parent=1 // pred_fallthru
      _
    // Predicated region
    $region26: #{_fused_forward.1} parent=1 // pred_check
      _
    $region27: #{_fused_forward.1} parent=1 // pred_check_branch
      %34 = sbr.rel (0) target = $region29
    $region28: #{_fused_forward.1} parent=1 // pred_region
      %s36 = ssub.s32 6144, 6144
      %37 = vsyncadd [#allocation5], %s36
      %s38 = sshll.u32 [#allocation4], 4
      %s39 = int_to_ptr.vmem [resolvable:$true] %s38
      %44 = dma.hbm_to_vmem [thread:$0]  %s7, 6144, %s39, [#allocation5], 64, 64, 4
    $region29: #{_fused_forward.1} parent=1 // pred_fallthru
      _
    // Predicated region
    $region30: #{_fused_forward.1} parent=1 // pred_check
      _
    $region31: #{_fused_forward.1} parent=1 // pred_check_branch
      %46 = sbr.rel (0) target = $region33
    $region32: #{_fused_forward.1} parent=1 // pred_region
      _
    $region33: #{_fused_forward.1} parent=1 // pred_fallthru
      _
    // Predicated region
    $region34: #{_fused_forward.1} parent=1 // pred_check
      _
    $region35: #{_fused_forward.1} parent=1 // pred_check_branch
      %48 = sbr.rel (0) target = $region37
    $region36: #{_fused_forward.1} parent=1 // pred_region
      %49 = dma.done [#allocation5], 6144
    $region37: #{_fused_forward.1} parent=1 // pred_fallthru
      _
    %s51 = sld [smem:[#allocation3]]
    %p52 = scmp.eq.s32.totalorder 0, 0
    // Predicated region
    $region38: #{_fused_forward.1} parent=1 // pred_check
      %p53 = pneg %p52
    $region39: #{_fused_forward.1} parent=1 // pred_check_branch
      %55 = sbr.rel (%p53) target = $region41
    $region40: #{_fused_forward.1} parent=1 // pred_region
      %v56 = vld [vmem:[%s5] sm:$0xff]
      %v57 = vld [vmem:[%s5 + $0x8] sm:$0xff]
      %58 = vst [vmem:[#allocation7] sm:$0xff] %v56
      %59 = vst [vmem:[#allocation7 + $0x8] sm:$0xff] %v57
      %v60 = vld [vmem:[%s6] sm:$0xff]
      %v61 = vld [vmem:[%s6 + $0x8] sm:$0xff]
      %62 = vst [vmem:[#allocation8] sm:$0xff] %v60
      %63 = vst [vmem:[#allocation8 + $0x8] sm:$0xff] %v61
      %vm64 = vcmask 0
      %65 = vst.msk [vmem:[#allocation10] sm:$0x1] %vm64, 0
    $region41: #{_fused_forward.1} parent=1 // pred_fallthru
      _
    %v66 = vld [vmem:[%s4] sm:$0xff]
    %v67 = vld [vmem:[%s4 + $0x8] sm:$0xff]
    %v68 = vld [vmem:[#allocation7] sm:$0xff]
    %v69 = vld [vmem:[#allocation7 + $0x8] sm:$0xff]
    %v70 = vld [vmem:[#allocation8] sm:$0xff]
    %v71 = vld [vmem:[#allocation8 + $0x8] sm:$0xff]
    %v72 = vld [vmem:[%s1] sm:$0x1]
    %v73 = vld [vmem:[%s1 + $0x1] sm:$0x1]
    %v74 = vld [vmem:[%s1 + $0x2] sm:$0x1]
    %v75 = vstv %s51
    %vm76 = vcmp.eq.s32.totalorder %v73, %v75
    %v77 = vlaneseq
    %v78 = vshrl.u32 %v77, 7
    %v79 = vadd.s32 %v78, 8
    %v80 = vlaneseq
    %v81 = vshrl.u32 %v80, 7
    %v82 = vsub.s32 0, %v81
    %v83 = vrot.slane %v72, %v82
    %vm84 = vcmp.eq.s32.totalorder %v78, %v83
    %vm85 = vcmp.eq.s32.totalorder %v79, %v83
    %v86 = vsel %vm76, 1, 0
    %v87 = vlaneseq
    %v88 = vshrl.u32 %v87, 7
    %v89 = vsub.s32 0, %v88
    %v90 = vrot.slane %v86, %v89
    %vm91 = vcmp.eq.s32.totalorder %v90, 1
    %vm92 = vmand %vm84, %vm91
    %vm93 = vmand %vm85, %vm91
    %v94 = vsel %vm92, 1, 0
    %v95 = vsel %vm93, 1, 0
    %v96 = vcvt.s32.f32 %v94
    %v97 = vcvt.s32.f32 %v95
    %v98 = vpack.c.bf16 %v97, %v96
    %v99 = vlaneseq
    %v100 = vshrl.u32 %v99, 7
    %v101 = vsub.s32 0, %v100
    %v102 = vrot.slane %v74, %v101
    %vm103 = vcmp.eq.s32.totalorder %v78, %v102
    %vm104 = vcmp.eq.s32.totalorder %v79, %v102
    %v105 = vsel %vm103, 1, 0
    %v106 = vsel %vm104, 1, 0
    %v107 = vcvt.s32.f32 %v105
    %v108 = vcvt.s32.f32 %v106
    %v109 = vpack.c.bf16 %v108, %v107
    %110 = vmatprep.subr.bf16.mxu0 0
    %111 = vmatpush1.bf16.xpose.msra.mxu0 %v109
    %112 = vmatprep.subr.bf16.mxu0 0
    %113 = vmatpush1.bf16.xpose.msra.mxu0 0
    %114 = vmatprep.subr.bf16.mxu0 0
    %115 = vmatpush1.bf16.xpose.msra.mxu0 0
    %116 = vmatprep.subr.bf16.mxu0 0
    %117 = vmatpush1.bf16.xpose.msra.mxu0 0
    %118 = vmatprep.subr.bf16.mxu0 0
    %119 = vmatpush1.bf16.xpose.msra.mxu0 0
    %120 = vmatprep.subr.bf16.mxu0 0
    %121 = vmatpush1.bf16.xpose.msra.mxu0 0
    %122 = vmatprep.subr.bf16.mxu0 0
    %123 = vmatpush1.bf16.xpose.msra.mxu0 0
    %124 = vmatprep.subr.bf16.mxu0 0
    %125 = vmatpush1.bf16.xpose.msra.mxu0 0
    %126 = vmatprep.subr.bf16.mxu0 0
    %127 = vmatpush1.bf16.xpose.msra.mxu0 0
    %128 = vmatprep.subr.bf16.mxu0 0
    %129 = vmatpush1.bf16.xpose.msra.mxu0 0
    %130 = vmatprep.subr.bf16.mxu0 0
    %131 = vmatpush1.bf16.xpose.msra.mxu0 0
    %132 = vmatprep.subr.bf16.mxu0 0
    %133 = vmatpush1.bf16.xpose.msra.mxu0 0
    %134 = vmatprep.subr.bf16.mxu0 0
    %135 = vmatpush1.bf16.xpose.msra.mxu0 0
    %136 = vmatprep.subr.bf16.mxu0 0
    %137 = vmatpush1.bf16.xpose.msra.mxu0 0
    %138 = vmatprep.subr.bf16.mxu0 0
    %139 = vmatpush1.bf16.xpose.msra.mxu0 0
    %140 = vmatprep.subr.bf16.mxu0 0
    %141 = vmatpush1.bf16.xpose.msra.mxu0 0
    %142 = vmatprep.mubr.bf16.mxu0 0
    %143 = vmatmul.mubr.bf16.gmra.mrb[0].mxu0 %v98
    %v144 = vpop.f32.mrb[0].mxu0
    %v145 = vadd.f32 0.0, %v144
    %v146 = vpop.f32.mrb[0].mxu0
    %v147 = vpop.f32.mrb[0].mxu0
    %v148 = vadd.f32 0.0, %v147
    %v149 = vpop.f32.mrb[0].mxu0
    %150 = vdwg.mxu0
    %v151 = vpack.c.bf16 %v148, %v145
    %v152 = vpack.c.bf16 %v67, %v66
    %vm153 = vcmask 130048
    %v155 = vsel %vm153, %v151, 0
    %157 = vmatprep.subr.bf16.mxu0 0
    %158 = vmatpush1.bf16.msra.mxu0 %v152
    %159 = vmatprep.subr.bf16.mxu0 0
    %160 = vmatpush1.bf16.msra.mxu0 0
    %161 = vmatprep.subr.bf16.mxu0 0
    %162 = vmatpush1.bf16.msra.mxu0 0
    %163 = vmatprep.subr.bf16.mxu0 0
    %164 = vmatpush1.bf16.msra.mxu0 0
    %165 = vmatprep.subr.bf16.mxu0 0
    %166 = vmatpush1.bf16.msra.mxu0 0
    %167 = vmatprep.subr.bf16.mxu0 0
    %168 = vmatpush1.bf16.msra.mxu0 0
    %169 = vmatprep.subr.bf16.mxu0 0
    %170 = vmatpush1.bf16.msra.mxu0 0
    %171 = vmatprep.subr.bf16.mxu0 0
    %172 = vmatpush1.bf16.msra.mxu0 0
    %173 = vmatprep.subr.bf16.mxu0 0
    %174 = vmatpush1.bf16.msra.mxu0 0
    %175 = vmatprep.subr.bf16.mxu0 0
    %176 = vmatpush1.bf16.msra.mxu0 0
    %177 = vmatprep.subr.bf16.mxu0 0
    %178 = vmatpush1.bf16.msra.mxu0 0
    %179 = vmatprep.subr.bf16.mxu0 0
    %180 = vmatpush1.bf16.msra.mxu0 0
    %181 = vmatprep.subr.bf16.mxu0 0
    %182 = vmatpush1.bf16.msra.mxu0 0
    %183 = vmatprep.subr.bf16.mxu0 0
    %184 = vmatpush1.bf16.msra.mxu0 0
    %185 = vmatprep.subr.bf16.mxu0 0
    %186 = vmatpush1.bf16.msra.mxu0 0
    %187 = vmatprep.subr.bf16.mxu0 0
    %188 = vmatpush1.bf16.msra.mxu0 0
    %189 = vmatprep.mubr.bf16.mxu0 0
    %190 = vmatmul.mubr.bf16.gmra.mrb[0].mxu0 %v155
    %v191 = vpop.f32.mrb[0].mxu0
    %v192 = vadd.f32 0.0, %v191
    %v193 = vpop.f32.mrb[0].mxu0
    %v194 = vpop.f32.mrb[0].mxu0
    %v195 = vadd.f32 0.0, %v194
    %v196 = vpop.f32.mrb[0].mxu0
    %197 = vdwg.mxu0
    %v198 = vsel %vm153, %v145, 0.0
    %199 = vadd.xlane.f32.xlu0 %v198
    %v200 = vpop.xlane.xlu0 %199
    %v201 = vsel %vm153, %v148, 0.0
    %202 = vadd.xlane.f32.xlu0 %v201
    %v203 = vpop.xlane.xlu0 %202
    %vm204 = vcmp.gt.f32.partialorder %v200, 0.0
    %vm205 = vcmp.gt.f32.partialorder %v203, 0.0
    %v206 = vcvt.s32.f32 %v86
    %vm207 = vcmask 1040384
    %v208 = vsel %vm207, %v206, 0.0
    %209 = vadd.xlane.f32.xlu0 %v208
    %v210 = vpop.xlane.xlu0 %209
    %vm211 = vcmp.gt.f32.partialorder %v210, 0.0
    %v212 = vpack.c.bf16 %v69, %v68
    %v213 = vld [vmem:[#allocation4] sm:$0xf]
    %v214 = vld [vmem:[#allocation4 + $0x4] sm:$0xf]
    %v215 = vld [vmem:[#allocation4 + $0x8] sm:$0xf]
    %v216 = vld [vmem:[#allocation4 + $0xc] sm:$0xf]
    %v217 = vld [vmem:[#allocation4 + $0x10] sm:$0xf]
    %v218 = vld [vmem:[#allocation4 + $0x14] sm:$0xf]
    %v219 = vld [vmem:[#allocation4 + $0x18] sm:$0xf]
    %v220 = vld [vmem:[#allocation4 + $0x1c] sm:$0xf]
    %v221 = vld [vmem:[#allocation4 + $0x20] sm:$0xf]
    %v222 = vld [vmem:[#allocation4 + $0x24] sm:$0xf]
    %v223 = vld [vmem:[#allocation4 + $0x28] sm:$0xf]
    %v224 = vld [vmem:[#allocation4 + $0x2c] sm:$0xf]
    %v225 = vld [vmem:[#allocation4 + $0x30] sm:$0xf]
    %v226 = vld [vmem:[#allocation4 + $0x34] sm:$0xf]
    %v227 = vld [vmem:[#allocation4 + $0x38] sm:$0xf]
    %v228 = vld [vmem:[#allocation4 + $0x3c] sm:$0xf]
    %v229 = vpack.c.bf16 %v195, %v192
    %s230 = scalar_lea.vmem [#allocation4], 64
    %v231 = vld [vmem:[%s230] sm:$0xf]
    %v232 = vld [vmem:[%s230 + $0x4] sm:$0xf]
    %v233 = vld [vmem:[%s230 + $0x8] sm:$0xf]
    %v234 = vld [vmem:[%s230 + $0xc] sm:$0xf]
    %v235 = vld [vmem:[%s230 + $0x10] sm:$0xf]
    %v236 = vld [vmem:[%s230 + $0x14] sm:$0xf]
    %v237 = vld [vmem:[%s230 + $0x18] sm:$0xf]
    %v238 = vld [vmem:[%s230 + $0x1c] sm:$0xf]
    %v239 = vld [vmem:[%s230 + $0x20] sm:$0xf]
    %v240 = vld [vmem:[%s230 + $0x24] sm:$0xf]
    %v241 = vld [vmem:[%s230 + $0x28] sm:$0xf]
    %v242 = vld [vmem:[%s230 + $0x2c] sm:$0xf]
    %v243 = vld [vmem:[%s230 + $0x30] sm:$0xf]
    %v244 = vld [vmem:[%s230 + $0x34] sm:$0xf]
    %v245 = vld [vmem:[%s230 + $0x38] sm:$0xf]
    %v246 = vld [vmem:[%s230 + $0x3c] sm:$0xf]
    %v263 = vunpack.c.l.b16 %v231
    %v264 = vunpack.c.l.b16 %v232
    %v265 = vunpack.c.l.b16 %v233
    %v266 = vunpack.c.l.b16 %v234
    %v267 = vunpack.c.l.b16 %v235
    %v268 = vunpack.c.l.b16 %v236
    %v269 = vunpack.c.l.b16 %v237
    %v270 = vunpack.c.l.b16 %v238
    %v271 = vunpack.c.l.b16 %v239
    %v272 = vunpack.c.l.b16 %v240
    %v273 = vunpack.c.l.b16 %v241
    %v274 = vunpack.c.l.b16 %v242
    %v275 = vunpack.c.l.b16 %v243
    %v276 = vunpack.c.l.b16 %v244
    %v277 = vunpack.c.l.b16 %v245
    %v278 = vunpack.c.l.b16 %v246
    %v279 = vpack.c.b16 %v264, %v263
    %v280 = vpack.c.b16 %v266, %v265
    %v281 = vpack.c.b16 %v268, %v267
    %v282 = vpack.c.b16 %v270, %v269
    %v283 = vpack.c.b16 %v272, %v271
    %v284 = vpack.c.b16 %v274, %v273
    %v285 = vpack.c.b16 %v276, %v275
    %v286 = vpack.c.b16 %v278, %v277
    %295 = vmatprep.subr.bf16.mxu0 0
    %296 = vmatpush1.bf16.msra.mxu0 %v279
    %297 = vmatprep.subr.bf16.mxu0 0
    %298 = vmatpush1.bf16.msra.mxu0 %v280
    %299 = vmatprep.subr.bf16.mxu0 0
    %300 = vmatpush1.bf16.msra.mxu0 %v281
    %301 = vmatprep.subr.bf16.mxu0 0
    %302 = vmatpush1.bf16.msra.mxu0 %v282
    %303 = vmatprep.subr.bf16.mxu0 0
    %304 = vmatpush1.bf16.msra.mxu0 %v283
    %305 = vmatprep.subr.bf16.mxu0 0
    %306 = vmatpush1.bf16.msra.mxu0 %v284
    %307 = vmatprep.subr.bf16.mxu0 0
    %308 = vmatpush1.bf16.msra.mxu0 %v285
    %309 = vmatprep.subr.bf16.mxu0 0
    %310 = vmatpush1.bf16.msra.mxu0 %v286
    %311 = vmatprep.subr.bf16.mxu0 0
    %312 = vmatpush1.bf16.msra.mxu0 0
    %313 = vmatprep.subr.bf16.mxu0 0
    %314 = vmatpush1.bf16.msra.mxu0 0
    %315 = vmatprep.subr.bf16.mxu0 0
    %316 = vmatpush1.bf16.msra.mxu0 0
    %317 = vmatprep.subr.bf16.mxu0 0
    %318 = vmatpush1.bf16.msra.mxu0 0
    %319 = vmatprep.subr.bf16.mxu0 0
    %320 = vmatpush1.bf16.msra.mxu0 0
    %321 = vmatprep.subr.bf16.mxu0 0
    %322 = vmatpush1.bf16.msra.mxu0 0
    %323 = vmatprep.subr.bf16.mxu0 0
    %324 = vmatpush1.bf16.msra.mxu0 0
    %325 = vmatprep.subr.bf16.mxu0 0
    %326 = vmatpush1.bf16.msra.mxu0 0
    %327 = vmatprep.mubr.bf16.mxu0 0
    %328 = vmatmul.mubr.bf16.gmra.mrb[0].mxu0 %v229
    %v329 = vpop.f32.mrb[0].mxu0
    %v330 = vadd.f32 0.0, %v329
    %v331 = vpop.f32.mrb[0].mxu0
    %v332 = vpop.f32.mrb[0].mxu0
    %v333 = vadd.f32 0.0, %v332
    %v334 = vpop.f32.mrb[0].mxu0
    %335 = vdwg.mxu0
    %v352 = vunpack.c.l.b16 %v213
    %v353 = vunpack.c.l.b16 %v214
    %v354 = vunpack.c.l.b16 %v215
    %v355 = vunpack.c.l.b16 %v216
    %v356 = vunpack.c.l.b16 %v217
    %v357 = vunpack.c.l.b16 %v218
    %v358 = vunpack.c.l.b16 %v219
    %v359 = vunpack.c.l.b16 %v220
    %v360 = vunpack.c.l.b16 %v221
    %v361 = vunpack.c.l.b16 %v222
    %v362 = vunpack.c.l.b16 %v223
    %v363 = vunpack.c.l.b16 %v224
    %v364 = vunpack.c.l.b16 %v225
    %v365 = vunpack.c.l.b16 %v226
    %v366 = vunpack.c.l.b16 %v227
    %v367 = vunpack.c.l.b16 %v228
    %v368 = vpack.c.b16 %v353, %v352
    %v369 = vpack.c.b16 %v355, %v354
    %v370 = vpack.c.b16 %v357, %v356
    %v371 = vpack.c.b16 %v359, %v358
    %v372 = vpack.c.b16 %v361, %v360
    %v373 = vpack.c.b16 %v363, %v362
    %v374 = vpack.c.b16 %v365, %v364
    %v375 = vpack.c.b16 %v367, %v366
    %384 = vmatprep.subr.bf16.mxu0 0
    %385 = vmatpush1.bf16.msra.mxu0 %v368
    %386 = vmatprep.subr.bf16.mxu0 0
    %387 = vmatpush1.bf16.msra.mxu0 %v369
    %388 = vmatprep.subr.bf16.mxu0 0
    %389 = vmatpush1.bf16.msra.mxu0 %v370
    %390 = vmatprep.subr.bf16.mxu0 0
    %391 = vmatpush1.bf16.msra.mxu0 %v371
    %392 = vmatprep.subr.bf16.mxu0 0
    %393 = vmatpush1.bf16.msra.mxu0 %v372
    %394 = vmatprep.subr.bf16.mxu0 0
    %395 = vmatpush1.bf16.msra.mxu0 %v373
    %396 = vmatprep.subr.bf16.mxu0 0
    %397 = vmatpush1.bf16.msra.mxu0 %v374
    %398 = vmatprep.subr.bf16.mxu0 0
    %399 = vmatpush1.bf16.msra.mxu0 %v375
    %400 = vmatprep.subr.bf16.mxu0 0
    %401 = vmatpush1.bf16.msra.mxu0 0
    %402 = vmatprep.subr.bf16.mxu0 0
    %403 = vmatpush1.bf16.msra.mxu0 0
    %404 = vmatprep.subr.bf16.mxu0 0
    %405 = vmatpush1.bf16.msra.mxu0 0
    %406 = vmatprep.subr.bf16.mxu0 0
    %407 = vmatpush1.bf16.msra.mxu0 0
    %408 = vmatprep.subr.bf16.mxu0 0
    %409 = vmatpush1.bf16.msra.mxu0 0
    %410 = vmatprep.subr.bf16.mxu0 0
    %411 = vmatpush1.bf16.msra.mxu0 0
    %412 = vmatprep.subr.bf16.mxu0 0
    %413 = vmatpush1.bf16.msra.mxu0 0
    %414 = vmatprep.subr.bf16.mxu0 0
    %415 = vmatpush1.bf16.msra.mxu0 0
    %416 = vmatprep.mubr.bf16.mxu0 0
    %417 = vmatmul.mubr.bf16.gmra.mrb[0].mxu0 %v212
    %v418 = vpop.f32.mrb[0].mxu0
    %v419 = vadd.f32 %v330, %v418
    %v420 = vpop.f32.mrb[0].mxu0
    %v421 = vpop.f32.mrb[0].mxu0
    %v422 = vadd.f32 %v333, %v421
    %v423 = vpop.f32.mrb[0].mxu0
    %424 = vdwg.mxu0
    %v425 = vld [vmem:[%s8] sm:$0x1]
    %v427 = vlaneseq
    %v428 = vshrl.u32 %v427, 7
    %v429 = vsub.s32 0, %v428
    %v430 = vrot.slane %v425, %v429
    %v432 = vadd.f32 %v419, %v430
    %v433 = vadd.f32 %v422, %v430
    %vm434 = vcmp.gt.f32.partialorder %v432, 0.0
    %vm435 = vcmp.gt.f32.partialorder %v433, 0.0
    %v436 = vmul.f32 %v432, 0.01
    %v437 = vmul.f32 %v433, 0.01
    %v438 = vsel %vm434, %v432, %v436
    %v439 = vsel %vm435, %v433, %v437
    %v440 = vsel %vm204, 1, 0
    %v441 = vsel %vm205, 1, 0
    %vm442 = vcmp.eq.s32.totalorder %v440, 1
    %vm443 = vcmp.eq.s32.totalorder %v441, 1
    %v444 = vsel %vm442, %v438, %v68
    %v445 = vsel %vm443, %v439, %v69
    %v446 = vld [vmem:[%s2] sm:$0x1]
    %v447 = vld [vmem:[%s2 + $0x1] sm:$0x1]
    %v448 = vld [vmem:[%s2 + $0x2] sm:$0x1]
    %vm449 = vcmp.eq.s32.totalorder %v447, %v75
    %v450 = vlaneseq
    %v451 = vshrl.u32 %v450, 7
    %v452 = vsub.s32 0, %v451
    %v453 = vrot.slane %v446, %v452
    %vm454 = vcmp.eq.s32.totalorder %v78, %v453
    %vm455 = vcmp.eq.s32.totalorder %v79, %v453
    %v456 = vsel %vm449, 1, 0
    %v457 = vlaneseq
    %v458 = vshrl.u32 %v457, 7
    %v459 = vsub.s32 0, %v458
    %v460 = vrot.slane %v456, %v459
    %vm461 = vcmp.eq.s32.totalorder %v460, 1
    %vm462 = vmand %vm454, %vm461
    %vm463 = vmand %vm455, %vm461
    %v464 = vsel %vm462, 1, 0
    %v465 = vsel %vm463, 1, 0
    %v466 = vcvt.s32.f32 %v464
    %v467 = vcvt.s32.f32 %v465
    %v468 = vpack.c.bf16 %v467, %v466
    %v469 = vlaneseq
    %v470 = vshrl.u32 %v469, 7
    %v471 = vsub.s32 0, %v470
    %v472 = vrot.slane %v448, %v471
    %vm473 = vcmp.eq.s32.totalorder %v78, %v472
    %vm474 = vcmp.eq.s32.totalorder %v79, %v472
    %v475 = vsel %vm473, 1, 0
    %v476 = vsel %vm474, 1, 0
    %v477 = vcvt.s32.f32 %v475
    %v478 = vcvt.s32.f32 %v476
    %v479 = vpack.c.bf16 %v478, %v477
    %480 = vmatprep.subr.bf16.mxu0 0
    %481 = vmatpush1.bf16.xpose.msra.mxu0 %v479
    %482 = vmatprep.subr.bf16.mxu0 0
    %483 = vmatpush1.bf16.xpose.msra.mxu0 0
    %484 = vmatprep.subr.bf16.mxu0 0
    %485 = vmatpush1.bf16.xpose.msra.mxu0 0
    %486 = vmatprep.subr.bf16.mxu0 0
    %487 = vmatpush1.bf16.xpose.msra.mxu0 0
    %488 = vmatprep.subr.bf16.mxu0 0
    %489 = vmatpush1.bf16.xpose.msra.mxu0 0
    %490 = vmatprep.subr.bf16.mxu0 0
    %491 = vmatpush1.bf16.xpose.msra.mxu0 0
    %492 = vmatprep.subr.bf16.mxu0 0
    %493 = vmatpush1.bf16.xpose.msra.mxu0 0
    %494 = vmatprep.subr.bf16.mxu0 0
    %495 = vmatpush1.bf16.xpose.msra.mxu0 0
    %496 = vmatprep.subr.bf16.mxu0 0
    %497 = vmatpush1.bf16.xpose.msra.mxu0 0
    %498 = vmatprep.subr.bf16.mxu0 0
    %499 = vmatpush1.bf16.xpose.msra.mxu0 0
    %500 = vmatprep.subr.bf16.mxu0 0
    %501 = vmatpush1.bf16.xpose.msra.mxu0 0
    %502 = vmatprep.subr.bf16.mxu0 0
    %503 = vmatpush1.bf16.xpose.msra.mxu0 0
    %504 = vmatprep.subr.bf16.mxu0 0
    %505 = vmatpush1.bf16.xpose.msra.mxu0 0
    %506 = vmatprep.subr.bf16.mxu0 0
    %507 = vmatpush1.bf16.xpose.msra.mxu0 0
    %508 = vmatprep.subr.bf16.mxu0 0
    %509 = vmatpush1.bf16.xpose.msra.mxu0 0
    %510 = vmatprep.subr.bf16.mxu0 0
    %511 = vmatpush1.bf16.xpose.msra.mxu0 0
    %512 = vmatprep.mubr.bf16.mxu0 0
    %513 = vmatmul.mubr.bf16.gmra.mrb[0].mxu0 %v468
    %v514 = vpop.f32.mrb[0].mxu0
    %v515 = vadd.f32 0.0, %v514
    %v516 = vpop.f32.mrb[0].mxu0
    %v517 = vpop.f32.mrb[0].mxu0
    %v518 = vadd.f32 0.0, %v517
    %v519 = vpop.f32.mrb[0].mxu0
    %520 = vdwg.mxu0
    %v521 = vpack.c.bf16 %v518, %v515
    %v522 = vpack.c.bf16 %v445, %v444
    %v524 = vsel %vm153, %v521, 0
    %526 = vmatprep.subr.bf16.mxu0 0
    %527 = vmatpush1.bf16.msra.mxu0 %v522
    %528 = vmatprep.subr.bf16.mxu0 0
    %529 = vmatpush1.bf16.msra.mxu0 0
    %530 = vmatprep.subr.bf16.mxu0 0
    %531 = vmatpush1.bf16.msra.mxu0 0
    %532 = vmatprep.subr.bf16.mxu0 0
    %533 = vmatpush1.bf16.msra.mxu0 0
    %534 = vmatprep.subr.bf16.mxu0 0
    %535 = vmatpush1.bf16.msra.mxu0 0
    %536 = vmatprep.subr.bf16.mxu0 0
    %537 = vmatpush1.bf16.msra.mxu0 0
    %538 = vmatprep.subr.bf16.mxu0 0
    %539 = vmatpush1.bf16.msra.mxu0 0
    %540 = vmatprep.subr.bf16.mxu0 0
    %541 = vmatpush1.bf16.msra.mxu0 0
    %542 = vmatprep.subr.bf16.mxu0 0
    %543 = vmatpush1.bf16.msra.mxu0 0
    %544 = vmatprep.subr.bf16.mxu0 0
    %545 = vmatpush1.bf16.msra.mxu0 0
    %546 = vmatprep.subr.bf16.mxu0 0
    %547 = vmatpush1.bf16.msra.mxu0 0
    %548 = vmatprep.subr.bf16.mxu0 0
    %549 = vmatpush1.bf16.msra.mxu0 0
    %550 = vmatprep.subr.bf16.mxu0 0
    %551 = vmatpush1.bf16.msra.mxu0 0
    %552 = vmatprep.subr.bf16.mxu0 0
    %553 = vmatpush1.bf16.msra.mxu0 0
    %554 = vmatprep.subr.bf16.mxu0 0
    %555 = vmatpush1.bf16.msra.mxu0 0
    %556 = vmatprep.subr.bf16.mxu0 0
    %557 = vmatpush1.bf16.msra.mxu0 0
    %558 = vmatprep.mubr.bf16.mxu0 0
    %559 = vmatmul.mubr.bf16.gmra.mrb[0].mxu0 %v524
    %v560 = vpop.f32.mrb[0].mxu0
    %v561 = vadd.f32 0.0, %v560
    %v562 = vpop.f32.mrb[0].mxu0
    %v563 = vpop.f32.mrb[0].mxu0
    %v564 = vadd.f32 0.0, %v563
    %v565 = vpop.f32.mrb[0].mxu0
    %566 = vdwg.mxu0
    %v567 = vsel %vm153, %v515, 0.0
    %568 = vadd.xlane.f32.xlu0 %v567
    %v569 = vpop.xlane.xlu0 %568
    %v570 = vsel %vm153, %v518, 0.0
    %571 = vadd.xlane.f32.xlu0 %v570
    %v572 = vpop.xlane.xlu0 %571
    %vm573 = vcmp.gt.f32.partialorder %v569, 0.0
    %vm574 = vcmp.gt.f32.partialorder %v572, 0.0
    %v575 = vcvt.s32.f32 %v456
    %v576 = vsel %vm207, %v575, 0.0
    %577 = vadd.xlane.f32.xlu0 %v576
    %v578 = vpop.xlane.xlu0 %577
    %vm579 = vcmp.gt.f32.partialorder %v578, 0.0
    %v580 = vpack.c.bf16 %v71, %v70
    %s581 = scalar_lea.vmem [#allocation4], 128
    %v582 = vld [vmem:[%s581] sm:$0xf]
    %v583 = vld [vmem:[%s581 + $0x4] sm:$0xf]
    %v584 = vld [vmem:[%s581 + $0x8] sm:$0xf]
    %v585 = vld [vmem:[%s581 + $0xc] sm:$0xf]
    %v586 = vld [vmem:[%s581 + $0x10] sm:$0xf]
    %v587 = vld [vmem:[%s581 + $0x14] sm:$0xf]
    %v588 = vld [vmem:[%s581 + $0x18] sm:$0xf]
    %v589 = vld [vmem:[%s581 + $0x1c] sm:$0xf]
    %v590 = vld [vmem:[%s581 + $0x20] sm:$0xf]
    %v591 = vld [vmem:[%s581 + $0x24] sm:$0xf]
    %v592 = vld [vmem:[%s581 + $0x28] sm:$0xf]
    %v593 = vld [vmem:[%s581 + $0x2c] sm:$0xf]
    %v594 = vld [vmem:[%s581 + $0x30] sm:$0xf]
    %v595 = vld [vmem:[%s581 + $0x34] sm:$0xf]
    %v596 = vld [vmem:[%s581 + $0x38] sm:$0xf]
    %v597 = vld [vmem:[%s581 + $0x3c] sm:$0xf]
    %v598 = vpack.c.bf16 %v564, %v561
    %s599 = scalar_lea.vmem [#allocation4], 192
    %v600 = vld [vmem:[%s599] sm:$0xf]
    %v601 = vld [vmem:[%s599 + $0x4] sm:$0xf]
    %v602 = vld [vmem:[%s599 + $0x8] sm:$0xf]
    %v603 = vld [vmem:[%s599 + $0xc] sm:$0xf]
    %v604 = vld [vmem:[%s599 + $0x10] sm:$0xf]
    %v605 = vld [vmem:[%s599 + $0x14] sm:$0xf]
    %v606 = vld [vmem:[%s599 + $0x18] sm:$0xf]
    %v607 = vld [vmem:[%s599 + $0x1c] sm:$0xf]
    %v608 = vld [vmem:[%s599 + $0x20] sm:$0xf]
    %v609 = vld [vmem:[%s599 + $0x24] sm:$0xf]
    %v610 = vld [vmem:[%s599 + $0x28] sm:$0xf]
    %v611 = vld [vmem:[%s599 + $0x2c] sm:$0xf]
    %v612 = vld [vmem:[%s599 + $0x30] sm:$0xf]
    %v613 = vld [vmem:[%s599 + $0x34] sm:$0xf]
    %v614 = vld [vmem:[%s599 + $0x38] sm:$0xf]
    %v615 = vld [vmem:[%s599 + $0x3c] sm:$0xf]
    %v632 = vunpack.c.l.b16 %v600
    %v633 = vunpack.c.l.b16 %v601
    %v634 = vunpack.c.l.b16 %v602
    %v635 = vunpack.c.l.b16 %v603
    %v636 = vunpack.c.l.b16 %v604
    %v637 = vunpack.c.l.b16 %v605
    %v638 = vunpack.c.l.b16 %v606
    %v639 = vunpack.c.l.b16 %v607
    %v640 = vunpack.c.l.b16 %v608
    %v641 = vunpack.c.l.b16 %v609
    %v642 = vunpack.c.l.b16 %v610
    %v643 = vunpack.c.l.b16 %v611
    %v644 = vunpack.c.l.b16 %v612
    %v645 = vunpack.c.l.b16 %v613
    %v646 = vunpack.c.l.b16 %v614
    %v647 = vunpack.c.l.b16 %v615
    %v648 = vpack.c.b16 %v633, %v632
    %v649 = vpack.c.b16 %v635, %v634
    %v650 = vpack.c.b16 %v637, %v636
    %v651 = vpack.c.b16 %v639, %v638
    %v652 = vpack.c.b16 %v641, %v640
    %v653 = vpack.c.b16 %v643, %v642
    %v654 = vpack.c.b16 %v645, %v644
    %v655 = vpack.c.b16 %v647, %v646
    %664 = vmatprep.subr.bf16.mxu0 0
    %665 = vmatpush1.bf16.msra.mxu0 %v648
    %666 = vmatprep.subr.bf16.mxu0 0
    %667 = vmatpush1.bf16.msra.mxu0 %v649
    %668 = vmatprep.subr.bf16.mxu0 0
    %669 = vmatpush1.bf16.msra.mxu0 %v650
    %670 = vmatprep.subr.bf16.mxu0 0
    %671 = vmatpush1.bf16.msra.mxu0 %v651
    %672 = vmatprep.subr.bf16.mxu0 0
    %673 = vmatpush1.bf16.msra.mxu0 %v652
    %674 = vmatprep.subr.bf16.mxu0 0
    %675 = vmatpush1.bf16.msra.mxu0 %v653
    %676 = vmatprep.subr.bf16.mxu0 0
    %677 = vmatpush1.bf16.msra.mxu0 %v654
    %678 = vmatprep.subr.bf16.mxu0 0
    %679 = vmatpush1.bf16.msra.mxu0 %v655
    %680 = vmatprep.subr.bf16.mxu0 0
    %681 = vmatpush1.bf16.msra.mxu0 0
    %682 = vmatprep.subr.bf16.mxu0 0
    %683 = vmatpush1.bf16.msra.mxu0 0
    %684 = vmatprep.subr.bf16.mxu0 0
    %685 = vmatpush1.bf16.msra.mxu0 0
    %686 = vmatprep.subr.bf16.mxu0 0
    %687 = vmatpush1.bf16.msra.mxu0 0
    %688 = vmatprep.subr.bf16.mxu0 0
    %689 = vmatpush1.bf16.msra.mxu0 0
    %690 = vmatprep.subr.bf16.mxu0 0
    %691 = vmatpush1.bf16.msra.mxu0 0
    %692 = vmatprep.subr.bf16.mxu0 0
    %693 = vmatpush1.bf16.msra.mxu0 0
    %694 = vmatprep.subr.bf16.mxu0 0
    %695 = vmatpush1.bf16.msra.mxu0 0
    %696 = vmatprep.mubr.bf16.mxu0 0
    %697 = vmatmul.mubr.bf16.gmra.mrb[0].mxu0 %v598
    %v698 = vpop.f32.mrb[0].mxu0
    %v699 = vadd.f32 0.0, %v698
    %v700 = vpop.f32.mrb[0].mxu0
    %v701 = vpop.f32.mrb[0].mxu0
    %v702 = vadd.f32 0.0, %v701
    %v703 = vpop.f32.mrb[0].mxu0
    %704 = vdwg.mxu0
    %v721 = vunpack.c.l.b16 %v582
    %v722 = vunpack.c.l.b16 %v583
    %v723 = vunpack.c.l.b16 %v584
    %v724 = vunpack.c.l.b16 %v585
    %v725 = vunpack.c.l.b16 %v586
    %v726 = vunpack.c.l.b16 %v587
    %v727 = vunpack.c.l.b16 %v588
    %v728 = vunpack.c.l.b16 %v589
    %v729 = vunpack.c.l.b16 %v590
    %v730 = vunpack.c.l.b16 %v591
    %v731 = vunpack.c.l.b16 %v592
    %v732 = vunpack.c.l.b16 %v593
    %v733 = vunpack.c.l.b16 %v594
    %v734 = vunpack.c.l.b16 %v595
    %v735 = vunpack.c.l.b16 %v596
    %v736 = vunpack.c.l.b16 %v597
    %v737 = vpack.c.b16 %v722, %v721
    %v738 = vpack.c.b16 %v724, %v723
    %v739 = vpack.c.b16 %v726, %v725
    %v740 = vpack.c.b16 %v728, %v727
    %v741 = vpack.c.b16 %v730, %v729
    %v742 = vpack.c.b16 %v732, %v731
    %v743 = vpack.c.b16 %v734, %v733
    %v744 = vpack.c.b16 %v736, %v735
    %753 = vmatprep.subr.bf16.mxu0 0
    %754 = vmatpush1.bf16.msra.mxu0 %v737
    %755 = vmatprep.subr.bf16.mxu0 0
    %756 = vmatpush1.bf16.msra.mxu0 %v738
    %757 = vmatprep.subr.bf16.mxu0 0
    %758 = vmatpush1.bf16.msra.mxu0 %v739
    %759 = vmatprep.subr.bf16.mxu0 0
    %760 = vmatpush1.bf16.msra.mxu0 %v740
    %761 = vmatprep.subr.bf16.mxu0 0
    %762 = vmatpush1.bf16.msra.mxu0 %v741
    %763 = vmatprep.subr.bf16.mxu0 0
    %764 = vmatpush1.bf16.msra.mxu0 %v742
    %765 = vmatprep.subr.bf16.mxu0 0
    %766 = vmatpush1.bf16.msra.mxu0 %v743
    %767 = vmatprep.subr.bf16.mxu0 0
    %768 = vmatpush1.bf16.msra.mxu0 %v744
    %769 = vmatprep.subr.bf16.mxu0 0
    %770 = vmatpush1.bf16.msra.mxu0 0
    %771 = vmatprep.subr.bf16.mxu0 0
    %772 = vmatpush1.bf16.msra.mxu0 0
    %773 = vmatprep.subr.bf16.mxu0 0
    %774 = vmatpush1.bf16.msra.mxu0 0
    %775 = vmatprep.subr.bf16.mxu0 0
    %776 = vmatpush1.bf16.msra.mxu0 0
    %777 = vmatprep.subr.bf16.mxu0 0
    %778 = vmatpush1.bf16.msra.mxu0 0
    %779 = vmatprep.subr.bf16.mxu0 0
    %780 = vmatpush1.bf16.msra.mxu0 0
    %781 = vmatprep.subr.bf16.mxu0 0
    %782 = vmatpush1.bf16.msra.mxu0 0
    %783 = vmatprep.subr.bf16.mxu0 0
    %784 = vmatpush1.bf16.msra.mxu0 0
    %785 = vmatprep.mubr.bf16.mxu0 0
    %786 = vmatmul.mubr.bf16.gmra.mrb[0].mxu0 %v580
    %v787 = vpop.f32.mrb[0].mxu0
    %v788 = vadd.f32 %v699, %v787
    %v789 = vpop.f32.mrb[0].mxu0
    %v790 = vpop.f32.mrb[0].mxu0
    %v791 = vadd.f32 %v702, %v790
    %v792 = vpop.f32.mrb[0].mxu0
    %793 = vdwg.mxu0
    %s794 = scalar_lea.vmem %s8, 1
    %v795 = vld [vmem:[%s794] sm:$0x1]
    %v797 = vlaneseq
    %v798 = vshrl.u32 %v797, 7
    %v799 = vsub.s32 0, %v798
    %v800 = vrot.slane %v795, %v799
    %v802 = vadd.f32 %v788, %v800
    %v803 = vadd.f32 %v791, %v800
    %vm804 = vcmp.gt.f32.partialorder %v802, 0.0
    %vm805 = vcmp.gt.f32.partialorder %v803, 0.0
    %v806 = vmul.f32 %v802, 0.01
    %v807 = vmul.f32 %v803, 0.01
    %v808 = vsel %vm804, %v802, %v806
    %v809 = vsel %vm805, %v803, %v807
    %v810 = vsel %vm573, 1, 0
    %v811 = vsel %vm574, 1, 0
    %vm812 = vcmp.eq.s32.totalorder %v810, 1
    %vm813 = vcmp.eq.s32.totalorder %v811, 1
    %v814 = vsel %vm812, %v808, %v70
    %v815 = vsel %vm813, %v809, %v71
    %v816 = vld [vmem:[%s3] sm:$0x1]
    %v817 = vld [vmem:[%s3 + $0x1] sm:$0x1]
    %v818 = vld [vmem:[%s3 + $0x2] sm:$0x1]
    %vm819 = vcmp.eq.s32.totalorder %v817, %v75
    %v820 = vlaneseq
    %v821 = vshrl.u32 %v820, 7
    %v822 = vsub.s32 0, %v821
    %v823 = vrot.slane %v816, %v822
    %vm824 = vcmp.eq.s32.totalorder %v78, %v823
    %vm825 = vcmp.eq.s32.totalorder %v79, %v823
    %v826 = vsel %vm819, 1, 0
    %v827 = vlaneseq
    %v828 = vshrl.u32 %v827, 7
    %v829 = vsub.s32 0, %v828
    %v830 = vrot.slane %v826, %v829
    %vm831 = vcmp.eq.s32.totalorder %v830, 1
    %vm832 = vmand %vm824, %vm831
    %vm833 = vmand %vm825, %vm831
    %v834 = vsel %vm832, 1, 0
    %v835 = vsel %vm833, 1, 0
    %v836 = vcvt.s32.f32 %v834
    %v837 = vcvt.s32.f32 %v835
    %v838 = vpack.c.bf16 %v837, %v836
    %v839 = vlaneseq
    %v840 = vshrl.u32 %v839, 7
    %v841 = vsub.s32 0, %v840
    %v842 = vrot.slane %v818, %v841
    %vm843 = vcmp.eq.s32.totalorder %v78, %v842
    %vm844 = vcmp.eq.s32.totalorder %v79, %v842
    %v845 = vsel %vm843, 1, 0
    %v846 = vsel %vm844, 1, 0
    %v847 = vcvt.s32.f32 %v845
    %v848 = vcvt.s32.f32 %v846
    %v849 = vpack.c.bf16 %v848, %v847
    %850 = vmatprep.subr.bf16.mxu0 0
    %851 = vmatpush1.bf16.xpose.msra.mxu0 %v849
    %852 = vmatprep.subr.bf16.mxu0 0
    %853 = vmatpush1.bf16.xpose.msra.mxu0 0
    %854 = vmatprep.subr.bf16.mxu0 0
    %855 = vmatpush1.bf16.xpose.msra.mxu0 0
    %856 = vmatprep.subr.bf16.mxu0 0
    %857 = vmatpush1.bf16.xpose.msra.mxu0 0
    %858 = vmatprep.subr.bf16.mxu0 0
    %859 = vmatpush1.bf16.xpose.msra.mxu0 0
    %860 = vmatprep.subr.bf16.mxu0 0
    %861 = vmatpush1.bf16.xpose.msra.mxu0 0
    %862 = vmatprep.subr.bf16.mxu0 0
    %863 = vmatpush1.bf16.xpose.msra.mxu0 0
    %864 = vmatprep.subr.bf16.mxu0 0
    %865 = vmatpush1.bf16.xpose.msra.mxu0 0
    %866 = vmatprep.subr.bf16.mxu0 0
    %867 = vmatpush1.bf16.xpose.msra.mxu0 0
    %868 = vmatprep.subr.bf16.mxu0 0
    %869 = vmatpush1.bf16.xpose.msra.mxu0 0
    %870 = vmatprep.subr.bf16.mxu0 0
    %871 = vmatpush1.bf16.xpose.msra.mxu0 0
    %872 = vmatprep.subr.bf16.mxu0 0
    %873 = vmatpush1.bf16.xpose.msra.mxu0 0
    %874 = vmatprep.subr.bf16.mxu0 0
    %875 = vmatpush1.bf16.xpose.msra.mxu0 0
    %876 = vmatprep.subr.bf16.mxu0 0
    %877 = vmatpush1.bf16.xpose.msra.mxu0 0
    %878 = vmatprep.subr.bf16.mxu0 0
    %879 = vmatpush1.bf16.xpose.msra.mxu0 0
    %880 = vmatprep.subr.bf16.mxu0 0
    %881 = vmatpush1.bf16.xpose.msra.mxu0 0
    %882 = vmatprep.mubr.bf16.mxu0 0
    %883 = vmatmul.mubr.bf16.gmra.mrb[0].mxu0 %v838
    %v884 = vpop.f32.mrb[0].mxu0
    %v885 = vadd.f32 0.0, %v884
    %v886 = vpop.f32.mrb[0].mxu0
    %v887 = vpop.f32.mrb[0].mxu0
    %v888 = vadd.f32 0.0, %v887
    %v889 = vpop.f32.mrb[0].mxu0
    %890 = vdwg.mxu0
    %v891 = vpack.c.bf16 %v888, %v885
    %v892 = vpack.c.bf16 %v815, %v814
    %v894 = vsel %vm153, %v891, 0
    %896 = vmatprep.subr.bf16.mxu0 0
    %897 = vmatpush1.bf16.msra.mxu0 %v892
    %898 = vmatprep.subr.bf16.mxu0 0
    %899 = vmatpush1.bf16.msra.mxu0 0
    %900 = vmatprep.subr.bf16.mxu0 0
    %901 = vmatpush1.bf16.msra.mxu0 0
    %902 = vmatprep.subr.bf16.mxu0 0
    %903 = vmatpush1.bf16.msra.mxu0 0
    %904 = vmatprep.subr.bf16.mxu0 0
    %905 = vmatpush1.bf16.msra.mxu0 0
    %906 = vmatprep.subr.bf16.mxu0 0
    %907 = vmatpush1.bf16.msra.mxu0 0
    %908 = vmatprep.subr.bf16.mxu0 0
    %909 = vmatpush1.bf16.msra.mxu0 0
    %910 = vmatprep.subr.bf16.mxu0 0
    %911 = vmatpush1.bf16.msra.mxu0 0
    %912 = vmatprep.subr.bf16.mxu0 0
    %913 = vmatpush1.bf16.msra.mxu0 0
    %914 = vmatprep.subr.bf16.mxu0 0
    %915 = vmatpush1.bf16.msra.mxu0 0
    %916 = vmatprep.subr.bf16.mxu0 0
    %917 = vmatpush1.bf16.msra.mxu0 0
    %918 = vmatprep.subr.bf16.mxu0 0
    %919 = vmatpush1.bf16.msra.mxu0 0
    %920 = vmatprep.subr.bf16.mxu0 0
    %921 = vmatpush1.bf16.msra.mxu0 0
    %922 = vmatprep.subr.bf16.mxu0 0
    %923 = vmatpush1.bf16.msra.mxu0 0
    %924 = vmatprep.subr.bf16.mxu0 0
    %925 = vmatpush1.bf16.msra.mxu0 0
    %926 = vmatprep.subr.bf16.mxu0 0
    %927 = vmatpush1.bf16.msra.mxu0 0
    %928 = vmatprep.mubr.bf16.mxu0 0
    %929 = vmatmul.mubr.bf16.gmra.mrb[0].mxu0 %v894
    %v930 = vpop.f32.mrb[0].mxu0
    %v931 = vadd.f32 0.0, %v930
    %v932 = vpop.f32.mrb[0].mxu0
    %v933 = vpop.f32.mrb[0].mxu0
    %v934 = vadd.f32 0.0, %v933
    %v935 = vpop.f32.mrb[0].mxu0
    %936 = vdwg.mxu0
    %v937 = vsel %vm153, %v885, 0.0
    %938 = vadd.xlane.f32.xlu0 %v937
    %v939 = vpop.xlane.xlu0 %938
    %v940 = vsel %vm153, %v888, 0.0
    %941 = vadd.xlane.f32.xlu0 %v940
    %v942 = vpop.xlane.xlu0 %941
    %vm943 = vcmp.gt.f32.partialorder %v939, 0.0
    %vm944 = vcmp.gt.f32.partialorder %v942, 0.0
    %v945 = vcvt.s32.f32 %v826
    %v946 = vsel %vm207, %v945, 0.0
    %947 = vadd.xlane.f32.xlu0 %v946
    %v948 = vpop.xlane.xlu0 %947
    %vm949 = vcmp.gt.f32.partialorder %v948, 0.0
    %s950 = scalar_lea.vmem [#allocation4], 256
    %v951 = vld [vmem:[%s950] sm:$0xf]
    %v952 = vld [vmem:[%s950 + $0x4] sm:$0xf]
    %v953 = vld [vmem:[%s950 + $0x8] sm:$0xf]
    %v954 = vld [vmem:[%s950 + $0xc] sm:$0xf]
    %v955 = vld [vmem:[%s950 + $0x10] sm:$0xf]
    %v956 = vld [vmem:[%s950 + $0x14] sm:$0xf]
    %v957 = vld [vmem:[%s950 + $0x18] sm:$0xf]
    %v958 = vld [vmem:[%s950 + $0x1c] sm:$0xf]
    %v959 = vld [vmem:[%s950 + $0x20] sm:$0xf]
    %v960 = vld [vmem:[%s950 + $0x24] sm:$0xf]
    %v961 = vld [vmem:[%s950 + $0x28] sm:$0xf]
    %v962 = vld [vmem:[%s950 + $0x2c] sm:$0xf]
    %v963 = vld [vmem:[%s950 + $0x30] sm:$0xf]
    %v964 = vld [vmem:[%s950 + $0x34] sm:$0xf]
    %v965 = vld [vmem:[%s950 + $0x38] sm:$0xf]
    %v966 = vld [vmem:[%s950 + $0x3c] sm:$0xf]
    %v967 = vpack.c.bf16 %v934, %v931
    %s968 = scalar_lea.vmem [#allocation4], 320
    %v969 = vld [vmem:[%s968] sm:$0xf]
    %v970 = vld [vmem:[%s968 + $0x4] sm:$0xf]
    %v971 = vld [vmem:[%s968 + $0x8] sm:$0xf]
    %v972 = vld [vmem:[%s968 + $0xc] sm:$0xf]
    %v973 = vld [vmem:[%s968 + $0x10] sm:$0xf]
    %v974 = vld [vmem:[%s968 + $0x14] sm:$0xf]
    %v975 = vld [vmem:[%s968 + $0x18] sm:$0xf]
    %v976 = vld [vmem:[%s968 + $0x1c] sm:$0xf]
    %v977 = vld [vmem:[%s968 + $0x20] sm:$0xf]
    %v978 = vld [vmem:[%s968 + $0x24] sm:$0xf]
    %v979 = vld [vmem:[%s968 + $0x28] sm:$0xf]
    %v980 = vld [vmem:[%s968 + $0x2c] sm:$0xf]
    %v981 = vld [vmem:[%s968 + $0x30] sm:$0xf]
    %v982 = vld [vmem:[%s968 + $0x34] sm:$0xf]
    %v983 = vld [vmem:[%s968 + $0x38] sm:$0xf]
    %v984 = vld [vmem:[%s968 + $0x3c] sm:$0xf]
    %v1001 = vunpack.c.l.b16 %v969
    %v1002 = vunpack.c.l.b16 %v970
    %v1003 = vunpack.c.l.b16 %v971
    %v1004 = vunpack.c.l.b16 %v972
    %v1005 = vunpack.c.l.b16 %v973
    %v1006 = vunpack.c.l.b16 %v974
    %v1007 = vunpack.c.l.b16 %v975
    %v1008 = vunpack.c.l.b16 %v976
    %v1009 = vunpack.c.l.b16 %v977
    %v1010 = vunpack.c.l.b16 %v978
    %v1011 = vunpack.c.l.b16 %v979
    %v1012 = vunpack.c.l.b16 %v980
    %v1013 = vunpack.c.l.b16 %v981
    %v1014 = vunpack.c.l.b16 %v982
    %v1015 = vunpack.c.l.b16 %v983
    %v1016 = vunpack.c.l.b16 %v984
    %v1017 = vpack.c.b16 %v1002, %v1001
    %v1018 = vpack.c.b16 %v1004, %v1003
    %v1019 = vpack.c.b16 %v1006, %v1005
    %v1020 = vpack.c.b16 %v1008, %v1007
    %v1021 = vpack.c.b16 %v1010, %v1009
    %v1022 = vpack.c.b16 %v1012, %v1011
    %v1023 = vpack.c.b16 %v1014, %v1013
    %v1024 = vpack.c.b16 %v1016, %v1015
    %1033 = vmatprep.subr.bf16.mxu0 0
    %1034 = vmatpush1.bf16.msra.mxu0 %v1017
    %1035 = vmatprep.subr.bf16.mxu0 0
    %1036 = vmatpush1.bf16.msra.mxu0 %v1018
    %1037 = vmatprep.subr.bf16.mxu0 0
    %1038 = vmatpush1.bf16.msra.mxu0 %v1019
    %1039 = vmatprep.subr.bf16.mxu0 0
    %1040 = vmatpush1.bf16.msra.mxu0 %v1020
    %1041 = vmatprep.subr.bf16.mxu0 0
    %1042 = vmatpush1.bf16.msra.mxu0 %v1021
    %1043 = vmatprep.subr.bf16.mxu0 0
    %1044 = vmatpush1.bf16.msra.mxu0 %v1022
    %1045 = vmatprep.subr.bf16.mxu0 0
    %1046 = vmatpush1.bf16.msra.mxu0 %v1023
    %1047 = vmatprep.subr.bf16.mxu0 0
    %1048 = vmatpush1.bf16.msra.mxu0 %v1024
    %1049 = vmatprep.subr.bf16.mxu0 0
    %1050 = vmatpush1.bf16.msra.mxu0 0
    %1051 = vmatprep.subr.bf16.mxu0 0
    %1052 = vmatpush1.bf16.msra.mxu0 0
    %1053 = vmatprep.subr.bf16.mxu0 0
    %1054 = vmatpush1.bf16.msra.mxu0 0
    %1055 = vmatprep.subr.bf16.mxu0 0
    %1056 = vmatpush1.bf16.msra.mxu0 0
    %1057 = vmatprep.subr.bf16.mxu0 0
    %1058 = vmatpush1.bf16.msra.mxu0 0
    %1059 = vmatprep.subr.bf16.mxu0 0
    %1060 = vmatpush1.bf16.msra.mxu0 0
    %1061 = vmatprep.subr.bf16.mxu0 0
    %1062 = vmatpush1.bf16.msra.mxu0 0
    %1063 = vmatprep.subr.bf16.mxu0 0
    %1064 = vmatpush1.bf16.msra.mxu0 0
    %1065 = vmatprep.mubr.bf16.mxu0 0
    %1066 = vmatmul.mubr.bf16.gmra.mrb[0].mxu0 %v967
    %v1067 = vpop.f32.mrb[0].mxu0
    %v1068 = vadd.f32 0.0, %v1067
    %v1069 = vpop.f32.mrb[0].mxu0
    %v1070 = vpop.f32.mrb[0].mxu0
    %v1071 = vadd.f32 0.0, %v1070
    %v1072 = vpop.f32.mrb[0].mxu0
    %1073 = vdwg.mxu0
    %v1090 = vunpack.c.l.b16 %v951
    %v1091 = vunpack.c.l.b16 %v952
    %v1092 = vunpack.c.l.b16 %v953
    %v1093 = vunpack.c.l.b16 %v954
    %v1094 = vunpack.c.l.b16 %v955
    %v1095 = vunpack.c.l.b16 %v956
    %v1096 = vunpack.c.l.b16 %v957
    %v1097 = vunpack.c.l.b16 %v958
    %v1098 = vunpack.c.l.b16 %v959
    %v1099 = vunpack.c.l.b16 %v960
    %v1100 = vunpack.c.l.b16 %v961
    %v1101 = vunpack.c.l.b16 %v962
    %v1102 = vunpack.c.l.b16 %v963
    %v1103 = vunpack.c.l.b16 %v964
    %v1104 = vunpack.c.l.b16 %v965
    %v1105 = vunpack.c.l.b16 %v966
    %v1106 = vpack.c.b16 %v1091, %v1090
    %v1107 = vpack.c.b16 %v1093, %v1092
    %v1108 = vpack.c.b16 %v1095, %v1094
    %v1109 = vpack.c.b16 %v1097, %v1096
    %v1110 = vpack.c.b16 %v1099, %v1098
    %v1111 = vpack.c.b16 %v1101, %v1100
    %v1112 = vpack.c.b16 %v1103, %v1102
    %v1113 = vpack.c.b16 %v1105, %v1104
    %1122 = vmatprep.subr.bf16.mxu0 0
    %1123 = vmatpush1.bf16.msra.mxu0 %v1106
    %1124 = vmatprep.subr.bf16.mxu0 0
    %1125 = vmatpush1.bf16.msra.mxu0 %v1107
    %1126 = vmatprep.subr.bf16.mxu0 0
    %1127 = vmatpush1.bf16.msra.mxu0 %v1108
    %1128 = vmatprep.subr.bf16.mxu0 0
    %1129 = vmatpush1.bf16.msra.mxu0 %v1109
    %1130 = vmatprep.subr.bf16.mxu0 0
    %1131 = vmatpush1.bf16.msra.mxu0 %v1110
    %1132 = vmatprep.subr.bf16.mxu0 0
    %1133 = vmatpush1.bf16.msra.mxu0 %v1111
    %1134 = vmatprep.subr.bf16.mxu0 0
    %1135 = vmatpush1.bf16.msra.mxu0 %v1112
    %1136 = vmatprep.subr.bf16.mxu0 0
    %1137 = vmatpush1.bf16.msra.mxu0 %v1113
    %1138 = vmatprep.subr.bf16.mxu0 0
    %1139 = vmatpush1.bf16.msra.mxu0 0
    %1140 = vmatprep.subr.bf16.mxu0 0
    %1141 = vmatpush1.bf16.msra.mxu0 0
    %1142 = vmatprep.subr.bf16.mxu0 0
    %1143 = vmatpush1.bf16.msra.mxu0 0
    %1144 = vmatprep.subr.bf16.mxu0 0
    %1145 = vmatpush1.bf16.msra.mxu0 0
    %1146 = vmatprep.subr.bf16.mxu0 0
    %1147 = vmatpush1.bf16.msra.mxu0 0
    %1148 = vmatprep.subr.bf16.mxu0 0
    %1149 = vmatpush1.bf16.msra.mxu0 0
    %1150 = vmatprep.subr.bf16.mxu0 0
    %1151 = vmatpush1.bf16.msra.mxu0 0
    %1152 = vmatprep.subr.bf16.mxu0 0
    %1153 = vmatpush1.bf16.msra.mxu0 0
    %1154 = vmatprep.mubr.bf16.mxu0 0
    %1155 = vmatmul.mubr.bf16.gmra.mrb[0].mxu0 %v892
    %v1156 = vpop.f32.mrb[0].mxu0
    %v1157 = vadd.f32 %v1068, %v1156
    %v1158 = vpop.f32.mrb[0].mxu0
    %v1159 = vpop.f32.mrb[0].mxu0
    %v1160 = vadd.f32 %v1071, %v1159
    %v1161 = vpop.f32.mrb[0].mxu0
    %1162 = vdwg.mxu0
    %s1163 = scalar_lea.vmem %s8, 2
    %v1164 = vld [vmem:[%s1163] sm:$0x1]
    %v1166 = vlaneseq
    %v1167 = vshrl.u32 %v1166, 7
    %v1168 = vsub.s32 0, %v1167
    %v1169 = vrot.slane %v1164, %v1168
    %v1171 = vadd.f32 %v1157, %v1169
    %v1172 = vadd.f32 %v1160, %v1169
    %vm1173 = vcmp.gt.f32.partialorder %v1171, 0.0
    %vm1174 = vcmp.gt.f32.partialorder %v1172, 0.0
    %v1175 = vmul.f32 %v1171, 0.01
    %v1176 = vmul.f32 %v1172, 0.01
    %v1177 = vsel %vm1173, %v1171, %v1175
    %v1178 = vsel %vm1174, %v1172, %v1176
    %v1179 = vsel %vm943, 1, 0
    %v1180 = vsel %vm944, 1, 0
    %vm1181 = vcmp.eq.s32.totalorder %v1179, 1
    %vm1182 = vcmp.eq.s32.totalorder %v1180, 1
    %v1183 = vsel %vm1181, %v1177, %v814
    %v1184 = vsel %vm1182, %v1178, %v815
    %1185 = vst [vmem:[#allocation7] sm:$0xff] %v444
    %1186 = vst [vmem:[#allocation7 + $0x8] sm:$0xff] %v445
    %1187 = vst [vmem:[#allocation8] sm:$0xff] %v1183
    %1188 = vst [vmem:[#allocation8 + $0x8] sm:$0xff] %v1184
    %vm1189 = vmor %vm211, %vm579
    %vm1190 = vmor %vm1189, %vm949
    %v1191 = vsel %vm1190, 1, 0
    %v1192 = vld [vmem:[#allocation10] sm:$0x1]
    %vm1193 = vcmp.gt.s32.totalorder %v1192, %v1191
    %v1194 = vsel %vm1193, %v1192, %v1191
    %vm1195 = vcmask 0
    %1196 = vst.msk [vmem:[#allocation10] sm:$0x1] %vm1195, %v1194
    // Predicated region
    $region42: #{_fused_forward.1} parent=1 // pred_check
      _
    $region43: #{_fused_forward.1} parent=1 // pred_check_branch
      %1198 = sbr.rel (0) target = $region45
    $region44: #{_fused_forward.1} parent=1 // pred_region
      %s1200 = ssub.s32 256, 256
      %1201 = vsyncadd [#allocation6], %s1200
      %s1202 = sshll.u32 [#allocation7], 4
      %s1203 = int_to_ptr.vmem [resolvable:$true] %s1202
      %1208 = dma.vmem_to_hbm [thread:$0]  %s1203, 256, %s9, [#allocation6], 128, 128, 8
    $region45: #{_fused_forward.1} parent=1 // pred_fallthru
      _
    // Predicated region
    $region46: #{_fused_forward.1} parent=1 // pred_check
      _
    $region47: #{_fused_forward.1} parent=1 // pred_check_branch
      %1210 = sbr.rel (0) target = $region49
    $region48: #{_fused_forward.1} parent=1 // pred_region
      %s1212 = ssub.s32 256, 256
      %1213 = vsyncadd [#allocation9], %s1212
      %s1214 = sshll.u32 [#allocation8], 4
      %s1215 = int_to_ptr.vmem [resolvable:$true] %s1214
      %1220 = dma.vmem_to_hbm [thread:$0]  %s1215, 256, %s10, [#allocation9], 128, 128, 8
    $region49: #{_fused_forward.1} parent=1 // pred_fallthru
      _
    // Predicated region
    $region50: #{_fused_forward.1} parent=1 // pred_check
      _
    $region51: #{_fused_forward.1} parent=1 // pred_check_branch
      %1222 = sbr.rel (0) target = $region53
    $region52: #{_fused_forward.1} parent=1 // pred_region
      %s1224 = ssub.s32 16, 16
      %1225 = vsyncadd [#allocation9], %s1224
      %s1227 = sshll.u32 [#allocation10], 4
      %s1228 = int_to_ptr.vmem [resolvable:$true] %s1227
      %1230 = dma.vmem_to_hbm [thread:$0]  %s1228, 16, %s11, [#allocation9]
    $region53: #{_fused_forward.1} parent=1 // pred_fallthru
      _
    // Predicated region
    $region54: #{_fused_forward.1} parent=1 // pred_check
      _
    $region55: #{_fused_forward.1} parent=1 // pred_check_branch
      %1232 = sbr.rel (0) target = $region57
    $region56: #{_fused_forward.1} parent=1 // pred_region
      %1233 = dma.done [#allocation6], 256
    $region57: #{_fused_forward.1} parent=1 // pred_fallthru
      _
    // Predicated region
    $region58: #{_fused_forward.1} parent=1 // pred_check
      _
    $region59: #{_fused_forward.1} parent=1 // pred_check_branch
      %1235 = sbr.rel (0) target = $region61
    $region60: #{_fused_forward.1} parent=1 // pred_region
      %1236 = dma.done [#allocation9], 256
    $region61: #{_fused_forward.1} parent=1 // pred_fallthru
      _
    // Predicated region
    $region62: #{_fused_forward.1} parent=1 // pred_check
      _
    $region63: #{_fused_forward.1} parent=1 // pred_check_branch
      %1238 = sbr.rel (0) target = $region65
    $region64: #{_fused_forward.1} parent=1 // pred_region
      %1239 = dma.done [#allocation9], 16
    $region65: #{_fused_forward.1} parent=1 // pred_fallthru
      _
    %1240 = vsyncpa [#allocation5], 1
    %1241 = vsyncpa [#allocation6], 1
    %1242 = vsyncpa [#allocation9], 1

</llo_original>
